<compile_context>
chip_gen: v7x
topology: tpu7x:2x2x1
jax: 0.10.0
libtpu: 0.0.40
codegen_flags: <defaults>
</compile_context>

<pallas_src>
import jax
import jax.numpy as jnp
from jax.experimental import pallas as pl
from jax.experimental.pallas import tpu as pltpu


# --------------------------------------------------------------------------
# Helpers
# --------------------------------------------------------------------------
def _round_up(n, m):
    return ((n + m - 1) // m) * m


def _layernorm(x, gamma, beta, eps=1e-5):
    mu = jnp.mean(x, axis=-1, keepdims=True)
    var = jnp.mean((x - mu) ** 2, axis=-1, keepdims=True)
    return (x - mu) * jax.lax.rsqrt(var + eps) * gamma + beta


# --------------------------------------------------------------------------
# Fused Critic kernel factory
# --------------------------------------------------------------------------
def make_critic_kernel(T, B, H, A, hid, encoder_layers, decoder_layers):
    assert encoder_layers >= 1 and decoder_layers >= 1

    def kernel(*refs):
        x_ref, tail_ref = refs[0], refs[1]          # (T*B, 1), (B, A+3)
        out_ref = refs[-1]

        # ---- MLP first-layer tail: independent of the GRU chain (hoisted) ----
        m0_ref = refs[2 + encoder_layers]           # (H+A+5, hid) slab
        w_se = m0_ref[0:H, :]                       # (H, hid)
        rest0 = m0_ref[H:H + A + 5, :]              # [w_act; w_a1; w_a2; b0; g0; be0]
        w_tail = rest0[0:A + 3, :]                  # (A+3, hid)
        g0 = rest0[A + 3:A + 4, :]
        be0 = rest0[A + 4:A + 5, :]
        # tail = [action_one_hot | arg1 | arg2 | 1]  -> act@Wact + a1*Wa1 + a2*Wa2 + b0
        base = jnp.dot(tail_ref[...].astype(jnp.float32), w_tail,
                       preferred_element_type=jnp.float32)      # (B, hid)

        # ------------------------------ GRU encoder --------------------------
        x_pack = x_ref[...].astype(jnp.float32)     # (T*B, 1), time-major
        idx = 2
        seq = None                                  # (T*B, H) input slab for layers > 0
        h = None
        for l in range(encoder_layers):
            w_ref = refs[idx]
            idx += 1
            d_in = 1 if l == 0 else H
            d_pad = _round_up(d_in, 8)
            whh = w_ref[d_pad:d_pad + H, :]         # fused (H, 3H) recurrent weights
            brows = w_ref[d_pad + H:d_pad + H + 2, :]     # (2, 3H)
            b_gi = brows[0:1, :]                    # bih + [bhh_r, bhh_z, 0]
            bhn = brows[1:2, 2 * H:3 * H]           # (1, H)  b_hh_n

            # Hoisted, h-independent input projection for ALL timesteps at once.
            if l == 0:
                wih = w_ref[0:1, :]                 # (1, 3H)  (d_in == 1)
                gi_all = x_pack * wih + b_gi        # (T*B, 3H): VPU broadcast mul
            else:
                wih = w_ref[0:H, :]                 # (H, 3H)
                gi_all = jnp.dot(seq, wih,
                                 preferred_element_type=jnp.float32) + b_gi

            h = jnp.zeros((B, H), jnp.float32)
            outs = []
            # T is static & small: fully unroll the serial recurrence.
            for t in range(T):
                gh = jnp.dot(h, whh, preferred_element_type=jnp.float32)  # (B, 3H)
                gi = gi_all[t * B:(t + 1) * B, :]
                r = jax.nn.sigmoid(gi[:, 0:H] + gh[:, 0:H])
                z = jax.nn.sigmoid(gi[:, H:2 * H] + gh[:, H:2 * H])
                n = jnp.tanh(gi[:, 2 * H:3 * H] + r * (gh[:, 2 * H:3 * H] + bhn))
                h = n + z * (h - n)                 # == (1-z)*n + z*h
                if l < encoder_layers - 1:
                    outs.append(h)                  # top layer keeps only final h
            if l < encoder_layers - 1:
                seq = jnp.concatenate(outs, axis=0)  # (T*B, H) packed slab

        se = h                                       # (B, H) state embedding

        # ------------------------------- MLP head -----------------------------
        idx += 1                                     # mlp0 slab already consumed
        hm = jnp.dot(se, w_se, preferred_element_type=jnp.float32) + base
        hm = jnp.maximum(_layernorm(hm, g0, be0), 0.0)

        for _ in range(decoder_layers - 1):
            h_ref = refs[idx]
            idx += 1
            w = h_ref[0:hid, :]
            rest = h_ref[hid:hid + 3, :]             # [b; gamma; beta]
            b, g, be = rest[0:1, :], rest[1:2, :], rest[2:3, :]
            hm = jnp.dot(hm, w, preferred_element_type=jnp.float32) + b
            hm = jnp.maximum(_layernorm(hm, g, be), 0.0)

        f_ref = refs[idx]                            # (hid+1, 1) slab: [wf; bf]
        wf = f_ref[0:hid, :]
        bf = f_ref[hid:hid + 1, :]
        out_ref[...] = jnp.dot(hm, wf, preferred_element_type=jnp.float32) + bf

    return kernel


# --------------------------------------------------------------------------
# Wrapper: one pallas_call, ~7 consolidated parameter slabs
# --------------------------------------------------------------------------
def critic_forward(packed, state, action_one_hot, arg1, arg2):
    B, T, _ = state.shape
    gru_slabs = packed["gru"]
    H = gru_slabs[0].shape[1] // 3
    A = action_one_hot.shape[-1]
    hid = packed["mlp0"].shape[1]
    encoder_layers = len(gru_slabs)
    decoder_layers = len(packed["mlp_hidden"]) + 1

    # time-major packing of the (B, T, 1) input -> (T*B, 1) slab
    x_pack = jnp.transpose(state.astype(jnp.float32), (1, 0, 2)).reshape(T * B, 1)
    ones = jnp.ones((B, 1), jnp.float32)
    tail = jnp.concatenate([action_one_hot.astype(jnp.float32),
                            arg1.astype(jnp.float32),
                            arg2.astype(jnp.float32), ones], axis=-1)   # (B, A+3)

    args = [x_pack, tail] + list(gru_slabs) + [packed["mlp0"]] \
        + list(packed["mlp_hidden"]) + [packed["final"]]

    vmem = pl.BlockSpec(memory_space=pltpu.MemorySpace.VMEM)
    kernel = make_critic_kernel(T, B, H, A, hid, encoder_layers, decoder_layers)
    return pl.pallas_call(
        kernel,
        out_shape=jax.ShapeDtypeStruct((B, 1), jnp.float32),
        in_specs=[vmem] * len(args),
        out_specs=vmem,
    )(*args)


# --------------------------------------------------------------------------
# Raw (PyTorch-layout) parameter init — deterministic, synthetic
# --------------------------------------------------------------------------
def init_params(key, embedding_dim, hidden_dim, encoder_layers, decoder_layers,
                num_actions):
    assert decoder_layers >= 1
    H, hid, A = embedding_dim, hidden_dim, num_actions
    n_keys = 4 * encoder_layers + 2 * (decoder_layers + 1)
    keys = iter(jax.random.split(key, n_keys))

    raw = {"gru": [], "mlp": []}
    for l in range(encoder_layers):
        d_in = 1 if l == 0 else H
        raw["gru"].append(dict(
            wih=jax.random.normal(next(keys), (3 * H, d_in), jnp.float32) * 0.1,
            whh=jax.random.normal(next(keys), (3 * H, H), jnp.float32) * 0.1,
            bih=jax.random.normal(next(keys), (3 * H,), jnp.float32) * 0.1,
            bhh=jax.random.normal(next(keys), (3 * H,), jnp.float32) * 0.1,
        ))

    dims = [H + A + 2] + [hid] * decoder_layers + [1]
    for i in range(len(dims) - 1):
        raw["mlp"].append(dict(
            w=jax.random.normal(next(keys), (dims[i + 1], dims[i]), jnp.float32) * 0.1,
            b=jax.random.normal(next(keys), (dims[i + 1],), jnp.float32) * 0.1,
            gamma=jnp.ones((dims[i + 1],), jnp.float32),
            beta=jnp.zeros((dims[i + 1],), jnp.float32),
        ))
    return raw


# --------------------------------------------------------------------------
# Host-side packing into one slab per layer (fused gates, folded biases)
# --------------------------------------------------------------------------
def pack_params(raw, H, A, hid):
    packed = {"gru": [], "mlp_hidden": []}

    for lp in raw["gru"]:
        d_in = lp["wih"].shape[1]
        d_pad = _round_up(d_in, 8)
        G = 3 * H
        wih_t = lp["wih"].T                          # (d_in, 3H), gate order r|z|n
        whh_t = lp["whh"].T                          # (H, 3H)
        bih, bhh = lp["bih"], lp["bhh"]
        b_gi = bih + jnp.concatenate([bhh[0:2 * H], jnp.zeros((H,), jnp.float32)])
        slab = jnp.zeros((d_pad + H + 2, G), jnp.float32)
        slab = slab.at[0:d_in, :].set(wih_t)
        slab = slab.at[d_pad:d_pad + H, :].set(whh_t)
        slab = slab.at[d_pad + H, :].set(b_gi)
        slab = slab.at[d_pad + H + 1, :].set(bhh)    # only lanes 2H:3H (b_hh_n) used
        packed["gru"].append(slab)

    # First MLP layer: [w_se; w_act; w_a1; w_a2; b0; gamma0; beta0]
    m0 = raw["mlp"][0]
    w0t = m0["w"].T                                  # (H+A+2, hid)
    slab0 = jnp.zeros((H + A + 5, hid), jnp.float32)
    slab0 = slab0.at[0:H + A + 2, :].set(w0t)
    slab0 = slab0.at[H + A + 2, :].set(m0["b"])
    slab0 = slab0.at[H + A + 3, :].set(m0["gamma"])
    slab0 = slab0.at[H + A + 4, :].set(m0["beta"])
    packed["mlp0"] = slab0

    # Hidden MLP layers: [w; b; gamma; beta]
    for lp in raw["mlp"][1:-1]:
        slab = jnp.zeros((hid + 3, hid), jnp.float32)
        slab = slab.at[0:hid, :].set(lp["w"].T)
        slab = slab.at[hid, :].set(lp["b"])
        slab = slab.at[hid + 1, :].set(lp["gamma"])
        slab = slab.at[hid + 2, :].set(lp["beta"])
        packed["mlp_hidden"].append(slab)

    # Final Linear(hid -> 1): [wf; bf]
    lf = raw["mlp"][-1]
    slabf = jnp.zeros((hid + 1, 1), jnp.float32)
    slabf = slabf.at[0:hid, :].set(lf["w"].T)
    slabf = slabf.at[hid, :].set(lf["b"])
    packed["final"] = slabf
    return packed


# --------------------------------------------------------------------------
# Pure-JAX reference (independent formulation, PyTorch semantics)
# --------------------------------------------------------------------------
def critic_forward_ref(raw, state, action_one_hot, arg1, arg2):
    B, T, _ = state.shape
    seq = state.astype(jnp.float32)
    for lp in raw["gru"]:
        H = lp["whh"].shape[1]
        wih, whh, bih, bhh = lp["wih"], lp["whh"], lp["bih"], lp["bhh"]
        wir, wiz, win = wih[0:H], wih[H:2 * H], wih[2 * H:3 * H]
        whr, whz, whn = whh[0:H], whh[H:2 * H], whh[2 * H:3 * H]
        bir, biz, bin_ = bih[0:H], bih[H:2 * H], bih[2 * H:3 * H]
        bhr, bhz, bhn = bhh[0:H], bhh[H:2 * H], bhh[2 * H:3 * H]
        h = jnp.zeros((B, H), jnp.float32)
        outs = []
        for t in range(T):
            x_t = seq[:, t, :]
            r = jax.nn.sigmoid(x_t @ wir.T + bir + h @ whr.T + bhr)
            z = jax.nn.sigmoid(x_t @ wiz.T + biz + h @ whz.T + bhz)
            n = jnp.tanh(x_t @ win.T + bin_ + r * (h @ whn.T + bhn))
            h = (1.0 - z) * n + z * h
            outs.append(h)
        seq = jnp.stack(outs, axis=1)
    x = seq[:, -1, :]
    x = jnp.concatenate([x, action_one_hot.astype(jnp.float32),
                         arg1.astype(jnp.float32), arg2.astype(jnp.float32)],
                        axis=-1)
    for lp in raw["mlp"][:-1]:
        x = x @ lp["w"].T + lp["b"]
        x = jnp.maximum(_layernorm(x, lp["gamma"], lp["beta"]), 0.0)
    last = raw["mlp"][-1]
    return x @ last["w"].T + last["b"]


if __name__ == "__main__":
    embedding_dim = 32
    hidden_dim = 32
    encoder_layers = 2
    decoder_layers = 2
    num_actions = 4
    B, T = 2, 8

    key = jax.random.PRNGKey(0)
    k_par, k_state, k_act, k_a1, k_a2 = jax.random.split(key, 5)

    raw = init_params(k_par, embedding_dim, hidden_dim, encoder_layers,
                      decoder_layers, num_actions)
    packed = pack_params(raw, embedding_dim, num_actions, hidden_dim)

    state = jax.random.normal(k_state, (B, T, 1), jnp.float32)
    action_idx = jax.random.randint(k_act, (B,), 0, num_actions)
    action_one_hot = jax.nn.one_hot(action_idx, num_actions, dtype=jnp.float32)
    arg1 = jax.random.normal(k_a1, (B, 1), jnp.float32)
    arg2 = jax.random.normal(k_a2, (B, 1), jnp.float32)

    reward = critic_forward(packed, state, action_one_hot, arg1, arg2)
    reward = jax.block_until_ready(reward)

    ref = critic_forward_ref(raw, state, action_one_hot, arg1, arg2)
    assert reward.shape == (B, 1), reward.shape
    assert jnp.allclose(reward, ref, atol=1e-3, rtol=1e-3), (reward, ref)

    print("KERNEL_OK")
</pallas_src>

<mosaic_0001>
module attributes {stable_mosaic.version = 11 : i64} {
  func.func @kernel(%arg0: memref<16x1xf32, #tpu.memory_space<vmem>>, %arg1: memref<2x7xf32, #tpu.memory_space<vmem>>, %arg2: memref<42x96xf32, #tpu.memory_space<vmem>>, %arg3: memref<66x96xf32, #tpu.memory_space<vmem>>, %arg4: memref<41x32xf32, #tpu.memory_space<vmem>>, %arg5: memref<35x32xf32, #tpu.memory_space<vmem>>, %arg6: memref<33x1xf32, #tpu.memory_space<vmem>>, %arg7: memref<2x1xf32, #tpu.memory_space<vmem>>) attributes {dimension_semantics = [], scalar_prefetch = 0 : i64, scratch_operands = 0 : i64, tpu.core_type = #tpu.core_type<tc>} {
    %c0 = arith.constant 0 : index
    %c0_0 = arith.constant 0 : index
    %0 = vector.load %arg4[%c0, %c0_0] : memref<41x32xf32, #tpu.memory_space<vmem>>, vector<32x32xf32>
    %c32 = arith.constant 32 : index
    %c0_1 = arith.constant 0 : index
    %1 = vector.load %arg4[%c32, %c0_1] : memref<41x32xf32, #tpu.memory_space<vmem>>, vector<9x32xf32>
    %2 = vector.extract_strided_slice %1 {offsets = [0, 0], sizes = [7, 32], strides = [1, 1]} : vector<9x32xf32> to vector<7x32xf32>
    %3 = vector.extract_strided_slice %1 {offsets = [7, 0], sizes = [1, 32], strides = [1, 1]} : vector<9x32xf32> to vector<1x32xf32>
    %4 = vector.extract_strided_slice %1 {offsets = [8, 0], sizes = [1, 32], strides = [1, 1]} : vector<9x32xf32> to vector<1x32xf32>
    %c0_2 = arith.constant 0 : index
    %c0_3 = arith.constant 0 : index
    %5 = vector.load %arg1[%c0_2, %c0_3] : memref<2x7xf32, #tpu.memory_space<vmem>>, vector<2x7xf32>
    %cst = arith.constant dense<0.000000e+00> : vector<2x32xf32>
    %6 = tpu.matmul %5, %2, %cst {dimension_numbers = #tpu.dot_dimension_numbers<[1], [0], [0], [1], [0, 0, 1, 1], [], []>} : vector<2x7xf32>, vector<7x32xf32>, vector<2x32xf32> -> vector<2x32xf32>
    %c0_4 = arith.constant 0 : index
    %c0_5 = arith.constant 0 : index
    %7 = vector.load %arg0[%c0_4, %c0_5] : memref<16x1xf32, #tpu.memory_space<vmem>>, vector<16x1xf32>
    %c8 = arith.constant 8 : index
    %c0_6 = arith.constant 0 : index
    %8 = vector.load %arg2[%c8, %c0_6] : memref<42x96xf32, #tpu.memory_space<vmem>>, vector<32x96xf32>
    %c40 = arith.constant 40 : index
    %c0_7 = arith.constant 0 : index
    %9 = vector.load %arg2[%c40, %c0_7] : memref<42x96xf32, #tpu.memory_space<vmem>>, vector<2x96xf32>
    %10 = vector.extract_strided_slice %9 {offsets = [0, 0], sizes = [1, 96], strides = [1, 1]} : vector<2x96xf32> to vector<1x96xf32>
    %11 = vector.extract_strided_slice %9 {offsets = [1, 64], sizes = [1, 32], strides = [1, 1]} : vector<2x96xf32> to vector<1x32xf32>
    %c0_8 = arith.constant 0 : index
    %c0_9 = arith.constant 0 : index
    %12 = vector.load %arg2[%c0_8, %c0_9] : memref<42x96xf32, #tpu.memory_space<vmem>>, vector<1x96xf32>
    %13 = vector.broadcast %7 : vector<16x1xf32> to vector<16x96xf32>
    %14 = vector.broadcast %12 : vector<1x96xf32> to vector<16x96xf32>
    %15 = arith.mulf %13, %14 : vector<16x96xf32>
    %16 = vector.broadcast %10 : vector<1x96xf32> to vector<16x96xf32>
    %17 = arith.addf %15, %16 : vector<16x96xf32>
    %cst_10 = arith.constant 0.000000e+00 : f32
    %18 = vector.broadcast %cst_10 : f32 to vector<2x32xf32>
    %cst_11 = arith.constant dense<0.000000e+00> : vector<2x96xf32>
    %19 = tpu.matmul %18, %8, %cst_11 {dimension_numbers = #tpu.dot_dimension_numbers<[1], [0], [0], [1], [0, 0, 1, 1], [], []>} : vector<2x32xf32>, vector<32x96xf32>, vector<2x96xf32> -> vector<2x96xf32>
    %20 = vector.extract_strided_slice %17 {offsets = [0, 0], sizes = [2, 96], strides = [1, 1]} : vector<16x96xf32> to vector<2x96xf32>
    %21 = vector.extract_strided_slice %20 {offsets = [0, 0], sizes = [2, 32], strides = [1, 1]} : vector<2x96xf32> to vector<2x32xf32>
    %22 = vector.extract_strided_slice %19 {offsets = [0, 0], sizes = [2, 32], strides = [1, 1]} : vector<2x96xf32> to vector<2x32xf32>
    %23 = arith.addf %21, %22 : vector<2x32xf32>
    %24 = arith.negf %23 : vector<2x32xf32>
    %25 = math.exp %24 : vector<2x32xf32>
    %cst_12 = arith.constant 1.000000e+00 : f32
    %26 = vector.broadcast %cst_12 : f32 to vector<2x32xf32>
    %27 = arith.addf %26, %25 : vector<2x32xf32>
    %28 = arith.divf %26, %27 : vector<2x32xf32>
    %29 = vector.extract_strided_slice %20 {offsets = [0, 32], sizes = [2, 32], strides = [1, 1]} : vector<2x96xf32> to vector<2x32xf32>
    %30 = vector.extract_strided_slice %19 {offsets = [0, 32], sizes = [2, 32], strides = [1, 1]} : vector<2x96xf32> to vector<2x32xf32>
    %31 = arith.addf %29, %30 : vector<2x32xf32>
    %32 = arith.negf %31 : vector<2x32xf32>
    %33 = math.exp %32 : vector<2x32xf32>
    %cst_13 = arith.constant 1.000000e+00 : f32
    %34 = vector.broadcast %cst_13 : f32 to vector<2x32xf32>
    %35 = arith.addf %34, %33 : vector<2x32xf32>
    %36 = arith.divf %34, %35 : vector<2x32xf32>
    %37 = vector.extract_strided_slice %20 {offsets = [0, 64], sizes = [2, 32], strides = [1, 1]} : vector<2x96xf32> to vector<2x32xf32>
    %38 = vector.extract_strided_slice %19 {offsets = [0, 64], sizes = [2, 32], strides = [1, 1]} : vector<2x96xf32> to vector<2x32xf32>
    %39 = vector.broadcast %11 : vector<1x32xf32> to vector<2x32xf32>
    %40 = arith.addf %38, %39 : vector<2x32xf32>
    %41 = arith.mulf %28, %40 : vector<2x32xf32>
    %42 = arith.addf %37, %41 : vector<2x32xf32>
    %43 = math.tanh %42 : vector<2x32xf32>
    %44 = arith.subf %18, %43 : vector<2x32xf32>
    %45 = arith.mulf %36, %44 : vector<2x32xf32>
    %46 = arith.addf %43, %45 : vector<2x32xf32>
    %cst_14 = arith.constant dense<0.000000e+00> : vector<2x96xf32>
    %47 = tpu.matmul %46, %8, %cst_14 {dimension_numbers = #tpu.dot_dimension_numbers<[1], [0], [0], [1], [0, 0, 1, 1], [], []>} : vector<2x32xf32>, vector<32x96xf32>, vector<2x96xf32> -> vector<2x96xf32>
    %48 = vector.extract_strided_slice %17 {offsets = [2, 0], sizes = [2, 96], strides = [1, 1]} : vector<16x96xf32> to vector<2x96xf32>
    %49 = vector.extract_strided_slice %48 {offsets = [0, 0], sizes = [2, 32], strides = [1, 1]} : vector<2x96xf32> to vector<2x32xf32>
    %50 = vector.extract_strided_slice %47 {offsets = [0, 0], sizes = [2, 32], strides = [1, 1]} : vector<2x96xf32> to vector<2x32xf32>
    %51 = arith.addf %49, %50 : vector<2x32xf32>
    %52 = arith.negf %51 : vector<2x32xf32>
    %53 = math.exp %52 : vector<2x32xf32>
    %cst_15 = arith.constant 1.000000e+00 : f32
    %54 = vector.broadcast %cst_15 : f32 to vector<2x32xf32>
    %55 = arith.addf %54, %53 : vector<2x32xf32>
    %56 = arith.divf %54, %55 : vector<2x32xf32>
    %57 = vector.extract_strided_slice %48 {offsets = [0, 32], sizes = [2, 32], strides = [1, 1]} : vector<2x96xf32> to vector<2x32xf32>
    %58 = vector.extract_strided_slice %47 {offsets = [0, 32], sizes = [2, 32], strides = [1, 1]} : vector<2x96xf32> to vector<2x32xf32>
    %59 = arith.addf %57, %58 : vector<2x32xf32>
    %60 = arith.negf %59 : vector<2x32xf32>
    %61 = math.exp %60 : vector<2x32xf32>
    %cst_16 = arith.constant 1.000000e+00 : f32
    %62 = vector.broadcast %cst_16 : f32 to vector<2x32xf32>
    %63 = arith.addf %62, %61 : vector<2x32xf32>
    %64 = arith.divf %62, %63 : vector<2x32xf32>
    %65 = vector.extract_strided_slice %48 {offsets = [0, 64], sizes = [2, 32], strides = [1, 1]} : vector<2x96xf32> to vector<2x32xf32>
    %66 = vector.extract_strided_slice %47 {offsets = [0, 64], sizes = [2, 32], strides = [1, 1]} : vector<2x96xf32> to vector<2x32xf32>
    %67 = vector.broadcast %11 : vector<1x32xf32> to vector<2x32xf32>
    %68 = arith.addf %66, %67 : vector<2x32xf32>
    %69 = arith.mulf %56, %68 : vector<2x32xf32>
    %70 = arith.addf %65, %69 : vector<2x32xf32>
    %71 = math.tanh %70 : vector<2x32xf32>
    %72 = arith.subf %46, %71 : vector<2x32xf32>
    %73 = arith.mulf %64, %72 : vector<2x32xf32>
    %74 = arith.addf %71, %73 : vector<2x32xf32>
    %cst_17 = arith.constant dense<0.000000e+00> : vector<2x96xf32>
    %75 = tpu.matmul %74, %8, %cst_17 {dimension_numbers = #tpu.dot_dimension_numbers<[1], [0], [0], [1], [0, 0, 1, 1], [], []>} : vector<2x32xf32>, vector<32x96xf32>, vector<2x96xf32> -> vector<2x96xf32>
    %76 = vector.extract_strided_slice %17 {offsets = [4, 0], sizes = [2, 96], strides = [1, 1]} : vector<16x96xf32> to vector<2x96xf32>
    %77 = vector.extract_strided_slice %76 {offsets = [0, 0], sizes = [2, 32], strides = [1, 1]} : vector<2x96xf32> to vector<2x32xf32>
    %78 = vector.extract_strided_slice %75 {offsets = [0, 0], sizes = [2, 32], strides = [1, 1]} : vector<2x96xf32> to vector<2x32xf32>
    %79 = arith.addf %77, %78 : vector<2x32xf32>
    %80 = arith.negf %79 : vector<2x32xf32>
    %81 = math.exp %80 : vector<2x32xf32>
    %cst_18 = arith.constant 1.000000e+00 : f32
    %82 = vector.broadcast %cst_18 : f32 to vector<2x32xf32>
    %83 = arith.addf %82, %81 : vector<2x32xf32>
    %84 = arith.divf %82, %83 : vector<2x32xf32>
    %85 = vector.extract_strided_slice %76 {offsets = [0, 32], sizes = [2, 32], strides = [1, 1]} : vector<2x96xf32> to vector<2x32xf32>
    %86 = vector.extract_strided_slice %75 {offsets = [0, 32], sizes = [2, 32], strides = [1, 1]} : vector<2x96xf32> to vector<2x32xf32>
    %87 = arith.addf %85, %86 : vector<2x32xf32>
    %88 = arith.negf %87 : vector<2x32xf32>
    %89 = math.exp %88 : vector<2x32xf32>
    %cst_19 = arith.constant 1.000000e+00 : f32
    %90 = vector.broadcast %cst_19 : f32 to vector<2x32xf32>
    %91 = arith.addf %90, %89 : vector<2x32xf32>
    %92 = arith.divf %90, %91 : vector<2x32xf32>
    %93 = vector.extract_strided_slice %76 {offsets = [0, 64], sizes = [2, 32], strides = [1, 1]} : vector<2x96xf32> to vector<2x32xf32>
    %94 = vector.extract_strided_slice %75 {offsets = [0, 64], sizes = [2, 32], strides = [1, 1]} : vector<2x96xf32> to vector<2x32xf32>
    %95 = vector.broadcast %11 : vector<1x32xf32> to vector<2x32xf32>
    %96 = arith.addf %94, %95 : vector<2x32xf32>
    %97 = arith.mulf %84, %96 : vector<2x32xf32>
    %98 = arith.addf %93, %97 : vector<2x32xf32>
    %99 = math.tanh %98 : vector<2x32xf32>
    %100 = arith.subf %74, %99 : vector<2x32xf32>
    %101 = arith.mulf %92, %100 : vector<2x32xf32>
    %102 = arith.addf %99, %101 : vector<2x32xf32>
    %cst_20 = arith.constant dense<0.000000e+00> : vector<2x96xf32>
    %103 = tpu.matmul %102, %8, %cst_20 {dimension_numbers = #tpu.dot_dimension_numbers<[1], [0], [0], [1], [0, 0, 1, 1], [], []>} : vector<2x32xf32>, vector<32x96xf32>, vector<2x96xf32> -> vector<2x96xf32>
    %104 = vector.extract_strided_slice %17 {offsets = [6, 0], sizes = [2, 96], strides = [1, 1]} : vector<16x96xf32> to vector<2x96xf32>
    %105 = vector.extract_strided_slice %104 {offsets = [0, 0], sizes = [2, 32], strides = [1, 1]} : vector<2x96xf32> to vector<2x32xf32>
    %106 = vector.extract_strided_slice %103 {offsets = [0, 0], sizes = [2, 32], strides = [1, 1]} : vector<2x96xf32> to vector<2x32xf32>
    %107 = arith.addf %105, %106 : vector<2x32xf32>
    %108 = arith.negf %107 : vector<2x32xf32>
    %109 = math.exp %108 : vector<2x32xf32>
    %cst_21 = arith.constant 1.000000e+00 : f32
    %110 = vector.broadcast %cst_21 : f32 to vector<2x32xf32>
    %111 = arith.addf %110, %109 : vector<2x32xf32>
    %112 = arith.divf %110, %111 : vector<2x32xf32>
    %113 = vector.extract_strided_slice %104 {offsets = [0, 32], sizes = [2, 32], strides = [1, 1]} : vector<2x96xf32> to vector<2x32xf32>
    %114 = vector.extract_strided_slice %103 {offsets = [0, 32], sizes = [2, 32], strides = [1, 1]} : vector<2x96xf32> to vector<2x32xf32>
    %115 = arith.addf %113, %114 : vector<2x32xf32>
    %116 = arith.negf %115 : vector<2x32xf32>
    %117 = math.exp %116 : vector<2x32xf32>
    %cst_22 = arith.constant 1.000000e+00 : f32
    %118 = vector.broadcast %cst_22 : f32 to vector<2x32xf32>
    %119 = arith.addf %118, %117 : vector<2x32xf32>
    %120 = arith.divf %118, %119 : vector<2x32xf32>
    %121 = vector.extract_strided_slice %104 {offsets = [0, 64], sizes = [2, 32], strides = [1, 1]} : vector<2x96xf32> to vector<2x32xf32>
    %122 = vector.extract_strided_slice %103 {offsets = [0, 64], sizes = [2, 32], strides = [1, 1]} : vector<2x96xf32> to vector<2x32xf32>
    %123 = vector.broadcast %11 : vector<1x32xf32> to vector<2x32xf32>
    %124 = arith.addf %122, %123 : vector<2x32xf32>
    %125 = arith.mulf %112, %124 : vector<2x32xf32>
    %126 = arith.addf %121, %125 : vector<2x32xf32>
    %127 = math.tanh %126 : vector<2x32xf32>
    %128 = arith.subf %102, %127 : vector<2x32xf32>
    %129 = arith.mulf %120, %128 : vector<2x32xf32>
    %130 = arith.addf %127, %129 : vector<2x32xf32>
    %cst_23 = arith.constant dense<0.000000e+00> : vector<2x96xf32>
    %131 = tpu.matmul %130, %8, %cst_23 {dimension_numbers = #tpu.dot_dimension_numbers<[1], [0], [0], [1], [0, 0, 1, 1], [], []>} : vector<2x32xf32>, vector<32x96xf32>, vector<2x96xf32> -> vector<2x96xf32>
    %132 = vector.extract_strided_slice %17 {offsets = [8, 0], sizes = [2, 96], strides = [1, 1]} : vector<16x96xf32> to vector<2x96xf32>
    %133 = vector.extract_strided_slice %132 {offsets = [0, 0], sizes = [2, 32], strides = [1, 1]} : vector<2x96xf32> to vector<2x32xf32>
    %134 = vector.extract_strided_slice %131 {offsets = [0, 0], sizes = [2, 32], strides = [1, 1]} : vector<2x96xf32> to vector<2x32xf32>
    %135 = arith.addf %133, %134 : vector<2x32xf32>
    %136 = arith.negf %135 : vector<2x32xf32>
    %137 = math.exp %136 : vector<2x32xf32>
    %cst_24 = arith.constant 1.000000e+00 : f32
    %138 = vector.broadcast %cst_24 : f32 to vector<2x32xf32>
    %139 = arith.addf %138, %137 : vector<2x32xf32>
    %140 = arith.divf %138, %139 : vector<2x32xf32>
    %141 = vector.extract_strided_slice %132 {offsets = [0, 32], sizes = [2, 32], strides = [1, 1]} : vector<2x96xf32> to vector<2x32xf32>
    %142 = vector.extract_strided_slice %131 {offsets = [0, 32], sizes = [2, 32], strides = [1, 1]} : vector<2x96xf32> to vector<2x32xf32>
    %143 = arith.addf %141, %142 : vector<2x32xf32>
    %144 = arith.negf %143 : vector<2x32xf32>
    %145 = math.exp %144 : vector<2x32xf32>
    %cst_25 = arith.constant 1.000000e+00 : f32
    %146 = vector.broadcast %cst_25 : f32 to vector<2x32xf32>
    %147 = arith.addf %146, %145 : vector<2x32xf32>
    %148 = arith.divf %146, %147 : vector<2x32xf32>
    %149 = vector.extract_strided_slice %132 {offsets = [0, 64], sizes = [2, 32], strides = [1, 1]} : vector<2x96xf32> to vector<2x32xf32>
    %150 = vector.extract_strided_slice %131 {offsets = [0, 64], sizes = [2, 32], strides = [1, 1]} : vector<2x96xf32> to vector<2x32xf32>
    %151 = vector.broadcast %11 : vector<1x32xf32> to vector<2x32xf32>
    %152 = arith.addf %150, %151 : vector<2x32xf32>
    %153 = arith.mulf %140, %152 : vector<2x32xf32>
    %154 = arith.addf %149, %153 : vector<2x32xf32>
    %155 = math.tanh %154 : vector<2x32xf32>
    %156 = arith.subf %130, %155 : vector<2x32xf32>
    %157 = arith.mulf %148, %156 : vector<2x32xf32>
    %158 = arith.addf %155, %157 : vector<2x32xf32>
    %cst_26 = arith.constant dense<0.000000e+00> : vector<2x96xf32>
    %159 = tpu.matmul %158, %8, %cst_26 {dimension_numbers = #tpu.dot_dimension_numbers<[1], [0], [0], [1], [0, 0, 1, 1], [], []>} : vector<2x32xf32>, vector<32x96xf32>, vector<2x96xf32> -> vector<2x96xf32>
    %160 = vector.extract_strided_slice %17 {offsets = [10, 0], sizes = [2, 96], strides = [1, 1]} : vector<16x96xf32> to vector<2x96xf32>
    %161 = vector.extract_strided_slice %160 {offsets = [0, 0], sizes = [2, 32], strides = [1, 1]} : vector<2x96xf32> to vector<2x32xf32>
    %162 = vector.extract_strided_slice %159 {offsets = [0, 0], sizes = [2, 32], strides = [1, 1]} : vector<2x96xf32> to vector<2x32xf32>
    %163 = arith.addf %161, %162 : vector<2x32xf32>
    %164 = arith.negf %163 : vector<2x32xf32>
    %165 = math.exp %164 : vector<2x32xf32>
    %cst_27 = arith.constant 1.000000e+00 : f32
    %166 = vector.broadcast %cst_27 : f32 to vector<2x32xf32>
    %167 = arith.addf %166, %165 : vector<2x32xf32>
    %168 = arith.divf %166, %167 : vector<2x32xf32>
    %169 = vector.extract_strided_slice %160 {offsets = [0, 32], sizes = [2, 32], strides = [1, 1]} : vector<2x96xf32> to vector<2x32xf32>
    %170 = vector.extract_strided_slice %159 {offsets = [0, 32], sizes = [2, 32], strides = [1, 1]} : vector<2x96xf32> to vector<2x32xf32>
    %171 = arith.addf %169, %170 : vector<2x32xf32>
    %172 = arith.negf %171 : vector<2x32xf32>
    %173 = math.exp %172 : vector<2x32xf32>
    %cst_28 = arith.constant 1.000000e+00 : f32
    %174 = vector.broadcast %cst_28 : f32 to vector<2x32xf32>
    %175 = arith.addf %174, %173 : vector<2x32xf32>
    %176 = arith.divf %174, %175 : vector<2x32xf32>
    %177 = vector.extract_strided_slice %160 {offsets = [0, 64], sizes = [2, 32], strides = [1, 1]} : vector<2x96xf32> to vector<2x32xf32>
    %178 = vector.extract_strided_slice %159 {offsets = [0, 64], sizes = [2, 32], strides = [1, 1]} : vector<2x96xf32> to vector<2x32xf32>
    %179 = vector.broadcast %11 : vector<1x32xf32> to vector<2x32xf32>
    %180 = arith.addf %178, %179 : vector<2x32xf32>
    %181 = arith.mulf %168, %180 : vector<2x32xf32>
    %182 = arith.addf %177, %181 : vector<2x32xf32>
    %183 = math.tanh %182 : vector<2x32xf32>
    %184 = arith.subf %158, %183 : vector<2x32xf32>
    %185 = arith.mulf %176, %184 : vector<2x32xf32>
    %186 = arith.addf %183, %185 : vector<2x32xf32>
    %cst_29 = arith.constant dense<0.000000e+00> : vector<2x96xf32>
    %187 = tpu.matmul %186, %8, %cst_29 {dimension_numbers = #tpu.dot_dimension_numbers<[1], [0], [0], [1], [0, 0, 1, 1], [], []>} : vector<2x32xf32>, vector<32x96xf32>, vector<2x96xf32> -> vector<2x96xf32>
    %188 = vector.extract_strided_slice %17 {offsets = [12, 0], sizes = [2, 96], strides = [1, 1]} : vector<16x96xf32> to vector<2x96xf32>
    %189 = vector.extract_strided_slice %188 {offsets = [0, 0], sizes = [2, 32], strides = [1, 1]} : vector<2x96xf32> to vector<2x32xf32>
    %190 = vector.extract_strided_slice %187 {offsets = [0, 0], sizes = [2, 32], strides = [1, 1]} : vector<2x96xf32> to vector<2x32xf32>
    %191 = arith.addf %189, %190 : vector<2x32xf32>
    %192 = arith.negf %191 : vector<2x32xf32>
    %193 = math.exp %192 : vector<2x32xf32>
    %cst_30 = arith.constant 1.000000e+00 : f32
    %194 = vector.broadcast %cst_30 : f32 to vector<2x32xf32>
    %195 = arith.addf %194, %193 : vector<2x32xf32>
    %196 = arith.divf %194, %195 : vector<2x32xf32>
    %197 = vector.extract_strided_slice %188 {offsets = [0, 32], sizes = [2, 32], strides = [1, 1]} : vector<2x96xf32> to vector<2x32xf32>
    %198 = vector.extract_strided_slice %187 {offsets = [0, 32], sizes = [2, 32], strides = [1, 1]} : vector<2x96xf32> to vector<2x32xf32>
    %199 = arith.addf %197, %198 : vector<2x32xf32>
    %200 = arith.negf %199 : vector<2x32xf32>
    %201 = math.exp %200 : vector<2x32xf32>
    %cst_31 = arith.constant 1.000000e+00 : f32
    %202 = vector.broadcast %cst_31 : f32 to vector<2x32xf32>
    %203 = arith.addf %202, %201 : vector<2x32xf32>
    %204 = arith.divf %202, %203 : vector<2x32xf32>
    %205 = vector.extract_strided_slice %188 {offsets = [0, 64], sizes = [2, 32], strides = [1, 1]} : vector<2x96xf32> to vector<2x32xf32>
    %206 = vector.extract_strided_slice %187 {offsets = [0, 64], sizes = [2, 32], strides = [1, 1]} : vector<2x96xf32> to vector<2x32xf32>
    %207 = vector.broadcast %11 : vector<1x32xf32> to vector<2x32xf32>
    %208 = arith.addf %206, %207 : vector<2x32xf32>
    %209 = arith.mulf %196, %208 : vector<2x32xf32>
    %210 = arith.addf %205, %209 : vector<2x32xf32>
    %211 = math.tanh %210 : vector<2x32xf32>
    %212 = arith.subf %186, %211 : vector<2x32xf32>
    %213 = arith.mulf %204, %212 : vector<2x32xf32>
    %214 = arith.addf %211, %213 : vector<2x32xf32>
    %cst_32 = arith.constant dense<0.000000e+00> : vector<2x96xf32>
    %215 = tpu.matmul %214, %8, %cst_32 {dimension_numbers = #tpu.dot_dimension_numbers<[1], [0], [0], [1], [0, 0, 1, 1], [], []>} : vector<2x32xf32>, vector<32x96xf32>, vector<2x96xf32> -> vector<2x96xf32>
    %216 = vector.extract_strided_slice %17 {offsets = [14, 0], sizes = [2, 96], strides = [1, 1]} : vector<16x96xf32> to vector<2x96xf32>
    %217 = vector.extract_strided_slice %216 {offsets = [0, 0], sizes = [2, 32], strides = [1, 1]} : vector<2x96xf32> to vector<2x32xf32>
    %218 = vector.extract_strided_slice %215 {offsets = [0, 0], sizes = [2, 32], strides = [1, 1]} : vector<2x96xf32> to vector<2x32xf32>
    %219 = arith.addf %217, %218 : vector<2x32xf32>
    %220 = arith.negf %219 : vector<2x32xf32>
    %221 = math.exp %220 : vector<2x32xf32>
    %cst_33 = arith.constant 1.000000e+00 : f32
    %222 = vector.broadcast %cst_33 : f32 to vector<2x32xf32>
    %223 = arith.addf %222, %221 : vector<2x32xf32>
    %224 = arith.divf %222, %223 : vector<2x32xf32>
    %225 = vector.extract_strided_slice %216 {offsets = [0, 32], sizes = [2, 32], strides = [1, 1]} : vector<2x96xf32> to vector<2x32xf32>
    %226 = vector.extract_strided_slice %215 {offsets = [0, 32], sizes = [2, 32], strides = [1, 1]} : vector<2x96xf32> to vector<2x32xf32>
    %227 = arith.addf %225, %226 : vector<2x32xf32>
    %228 = arith.negf %227 : vector<2x32xf32>
    %229 = math.exp %228 : vector<2x32xf32>
    %cst_34 = arith.constant 1.000000e+00 : f32
    %230 = vector.broadcast %cst_34 : f32 to vector<2x32xf32>
    %231 = arith.addf %230, %229 : vector<2x32xf32>
    %232 = arith.divf %230, %231 : vector<2x32xf32>
    %233 = vector.extract_strided_slice %216 {offsets = [0, 64], sizes = [2, 32], strides = [1, 1]} : vector<2x96xf32> to vector<2x32xf32>
    %234 = vector.extract_strided_slice %215 {offsets = [0, 64], sizes = [2, 32], strides = [1, 1]} : vector<2x96xf32> to vector<2x32xf32>
    %235 = vector.broadcast %11 : vector<1x32xf32> to vector<2x32xf32>
    %236 = arith.addf %234, %235 : vector<2x32xf32>
    %237 = arith.mulf %224, %236 : vector<2x32xf32>
    %238 = arith.addf %233, %237 : vector<2x32xf32>
    %239 = math.tanh %238 : vector<2x32xf32>
    %240 = arith.subf %214, %239 : vector<2x32xf32>
    %241 = arith.mulf %232, %240 : vector<2x32xf32>
    %242 = arith.addf %239, %241 : vector<2x32xf32>
    %243 = tpu.concatenate %46, %74, %102, %130, %158, %186, %214, %242 in 0 : vector<2x32xf32>, vector<2x32xf32>, vector<2x32xf32>, vector<2x32xf32>, vector<2x32xf32>, vector<2x32xf32>, vector<2x32xf32>, vector<2x32xf32> -> vector<16x32xf32>
    %c32_35 = arith.constant 32 : index
    %c0_36 = arith.constant 0 : index
    %244 = vector.load %arg3[%c32_35, %c0_36] : memref<66x96xf32, #tpu.memory_space<vmem>>, vector<32x96xf32>
    %c64 = arith.constant 64 : index
    %c0_37 = arith.constant 0 : index
    %245 = vector.load %arg3[%c64, %c0_37] : memref<66x96xf32, #tpu.memory_space<vmem>>, vector<2x96xf32>
    %246 = vector.extract_strided_slice %245 {offsets = [0, 0], sizes = [1, 96], strides = [1, 1]} : vector<2x96xf32> to vector<1x96xf32>
    %247 = vector.extract_strided_slice %245 {offsets = [1, 64], sizes = [1, 32], strides = [1, 1]} : vector<2x96xf32> to vector<1x32xf32>
    %c0_38 = arith.constant 0 : index
    %c0_39 = arith.constant 0 : index
    %248 = vector.load %arg3[%c0_38, %c0_39] : memref<66x96xf32, #tpu.memory_space<vmem>>, vector<32x96xf32>
    %cst_40 = arith.constant dense<0.000000e+00> : vector<16x96xf32>
    %249 = tpu.matmul %243, %248, %cst_40 {dimension_numbers = #tpu.dot_dimension_numbers<[1], [0], [0], [1], [0, 0, 1, 1], [], []>} : vector<16x32xf32>, vector<32x96xf32>, vector<16x96xf32> -> vector<16x96xf32>
    %250 = vector.broadcast %246 : vector<1x96xf32> to vector<16x96xf32>
    %251 = arith.addf %249, %250 : vector<16x96xf32>
    %cst_41 = arith.constant 0.000000e+00 : f32
    %252 = vector.broadcast %cst_41 : f32 to vector<2x32xf32>
    %cst_42 = arith.constant dense<0.000000e+00> : vector<2x96xf32>
    %253 = tpu.matmul %252, %244, %cst_42 {dimension_numbers = #tpu.dot_dimension_numbers<[1], [0], [0], [1], [0, 0, 1, 1], [], []>} : vector<2x32xf32>, vector<32x96xf32>, vector<2x96xf32> -> vector<2x96xf32>
    %254 = vector.extract_strided_slice %251 {offsets = [0, 0], sizes = [2, 96], strides = [1, 1]} : vector<16x96xf32> to vector<2x96xf32>
    %255 = vector.extract_strided_slice %254 {offsets = [0, 0], sizes = [2, 32], strides = [1, 1]} : vector<2x96xf32> to vector<2x32xf32>
    %256 = vector.extract_strided_slice %253 {offsets = [0, 0], sizes = [2, 32], strides = [1, 1]} : vector<2x96xf32> to vector<2x32xf32>
    %257 = arith.addf %255, %256 : vector<2x32xf32>
    %258 = arith.negf %257 : vector<2x32xf32>
    %259 = math.exp %258 : vector<2x32xf32>
    %cst_43 = arith.constant 1.000000e+00 : f32
    %260 = vector.broadcast %cst_43 : f32 to vector<2x32xf32>
    %261 = arith.addf %260, %259 : vector<2x32xf32>
    %262 = arith.divf %260, %261 : vector<2x32xf32>
    %263 = vector.extract_strided_slice %254 {offsets = [0, 32], sizes = [2, 32], strides = [1, 1]} : vector<2x96xf32> to vector<2x32xf32>
    %264 = vector.extract_strided_slice %253 {offsets = [0, 32], sizes = [2, 32], strides = [1, 1]} : vector<2x96xf32> to vector<2x32xf32>
    %265 = arith.addf %263, %264 : vector<2x32xf32>
    %266 = arith.negf %265 : vector<2x32xf32>
    %267 = math.exp %266 : vector<2x32xf32>
    %cst_44 = arith.constant 1.000000e+00 : f32
    %268 = vector.broadcast %cst_44 : f32 to vector<2x32xf32>
    %269 = arith.addf %268, %267 : vector<2x32xf32>
    %270 = arith.divf %268, %269 : vector<2x32xf32>
    %271 = vector.extract_strided_slice %254 {offsets = [0, 64], sizes = [2, 32], strides = [1, 1]} : vector<2x96xf32> to vector<2x32xf32>
    %272 = vector.extract_strided_slice %253 {offsets = [0, 64], sizes = [2, 32], strides = [1, 1]} : vector<2x96xf32> to vector<2x32xf32>
    %273 = vector.broadcast %247 : vector<1x32xf32> to vector<2x32xf32>
    %274 = arith.addf %272, %273 : vector<2x32xf32>
    %275 = arith.mulf %262, %274 : vector<2x32xf32>
    %276 = arith.addf %271, %275 : vector<2x32xf32>
    %277 = math.tanh %276 : vector<2x32xf32>
    %278 = arith.subf %252, %277 : vector<2x32xf32>
    %279 = arith.mulf %270, %278 : vector<2x32xf32>
    %280 = arith.addf %277, %279 : vector<2x32xf32>
    %cst_45 = arith.constant dense<0.000000e+00> : vector<2x96xf32>
    %281 = tpu.matmul %280, %244, %cst_45 {dimension_numbers = #tpu.dot_dimension_numbers<[1], [0], [0], [1], [0, 0, 1, 1], [], []>} : vector<2x32xf32>, vector<32x96xf32>, vector<2x96xf32> -> vector<2x96xf32>
    %282 = vector.extract_strided_slice %251 {offsets = [2, 0], sizes = [2, 96], strides = [1, 1]} : vector<16x96xf32> to vector<2x96xf32>
    %283 = vector.extract_strided_slice %282 {offsets = [0, 0], sizes = [2, 32], strides = [1, 1]} : vector<2x96xf32> to vector<2x32xf32>
    %284 = vector.extract_strided_slice %281 {offsets = [0, 0], sizes = [2, 32], strides = [1, 1]} : vector<2x96xf32> to vector<2x32xf32>
    %285 = arith.addf %283, %284 : vector<2x32xf32>
    %286 = arith.negf %285 : vector<2x32xf32>
    %287 = math.exp %286 : vector<2x32xf32>
    %cst_46 = arith.constant 1.000000e+00 : f32
    %288 = vector.broadcast %cst_46 : f32 to vector<2x32xf32>
    %289 = arith.addf %288, %287 : vector<2x32xf32>
    %290 = arith.divf %288, %289 : vector<2x32xf32>
    %291 = vector.extract_strided_slice %282 {offsets = [0, 32], sizes = [2, 32], strides = [1, 1]} : vector<2x96xf32> to vector<2x32xf32>
    %292 = vector.extract_strided_slice %281 {offsets = [0, 32], sizes = [2, 32], strides = [1, 1]} : vector<2x96xf32> to vector<2x32xf32>
    %293 = arith.addf %291, %292 : vector<2x32xf32>
    %294 = arith.negf %293 : vector<2x32xf32>
    %295 = math.exp %294 : vector<2x32xf32>
    %cst_47 = arith.constant 1.000000e+00 : f32
    %296 = vector.broadcast %cst_47 : f32 to vector<2x32xf32>
    %297 = arith.addf %296, %295 : vector<2x32xf32>
    %298 = arith.divf %296, %297 : vector<2x32xf32>
    %299 = vector.extract_strided_slice %282 {offsets = [0, 64], sizes = [2, 32], strides = [1, 1]} : vector<2x96xf32> to vector<2x32xf32>
    %300 = vector.extract_strided_slice %281 {offsets = [0, 64], sizes = [2, 32], strides = [1, 1]} : vector<2x96xf32> to vector<2x32xf32>
    %301 = vector.broadcast %247 : vector<1x32xf32> to vector<2x32xf32>
    %302 = arith.addf %300, %301 : vector<2x32xf32>
    %303 = arith.mulf %290, %302 : vector<2x32xf32>
    %304 = arith.addf %299, %303 : vector<2x32xf32>
    %305 = math.tanh %304 : vector<2x32xf32>
    %306 = arith.subf %280, %305 : vector<2x32xf32>
    %307 = arith.mulf %298, %306 : vector<2x32xf32>
    %308 = arith.addf %305, %307 : vector<2x32xf32>
    %cst_48 = arith.constant dense<0.000000e+00> : vector<2x96xf32>
    %309 = tpu.matmul %308, %244, %cst_48 {dimension_numbers = #tpu.dot_dimension_numbers<[1], [0], [0], [1], [0, 0, 1, 1], [], []>} : vector<2x32xf32>, vector<32x96xf32>, vector<2x96xf32> -> vector<2x96xf32>
    %310 = vector.extract_strided_slice %251 {offsets = [4, 0], sizes = [2, 96], strides = [1, 1]} : vector<16x96xf32> to vector<2x96xf32>
    %311 = vector.extract_strided_slice %310 {offsets = [0, 0], sizes = [2, 32], strides = [1, 1]} : vector<2x96xf32> to vector<2x32xf32>
    %312 = vector.extract_strided_slice %309 {offsets = [0, 0], sizes = [2, 32], strides = [1, 1]} : vector<2x96xf32> to vector<2x32xf32>
    %313 = arith.addf %311, %312 : vector<2x32xf32>
    %314 = arith.negf %313 : vector<2x32xf32>
    %315 = math.exp %314 : vector<2x32xf32>
    %cst_49 = arith.constant 1.000000e+00 : f32
    %316 = vector.broadcast %cst_49 : f32 to vector<2x32xf32>
    %317 = arith.addf %316, %315 : vector<2x32xf32>
    %318 = arith.divf %316, %317 : vector<2x32xf32>
    %319 = vector.extract_strided_slice %310 {offsets = [0, 32], sizes = [2, 32], strides = [1, 1]} : vector<2x96xf32> to vector<2x32xf32>
    %320 = vector.extract_strided_slice %309 {offsets = [0, 32], sizes = [2, 32], strides = [1, 1]} : vector<2x96xf32> to vector<2x32xf32>
    %321 = arith.addf %319, %320 : vector<2x32xf32>
    %322 = arith.negf %321 : vector<2x32xf32>
    %323 = math.exp %322 : vector<2x32xf32>
    %cst_50 = arith.constant 1.000000e+00 : f32
    %324 = vector.broadcast %cst_50 : f32 to vector<2x32xf32>
    %325 = arith.addf %324, %323 : vector<2x32xf32>
    %326 = arith.divf %324, %325 : vector<2x32xf32>
    %327 = vector.extract_strided_slice %310 {offsets = [0, 64], sizes = [2, 32], strides = [1, 1]} : vector<2x96xf32> to vector<2x32xf32>
    %328 = vector.extract_strided_slice %309 {offsets = [0, 64], sizes = [2, 32], strides = [1, 1]} : vector<2x96xf32> to vector<2x32xf32>
    %329 = vector.broadcast %247 : vector<1x32xf32> to vector<2x32xf32>
    %330 = arith.addf %328, %329 : vector<2x32xf32>
    %331 = arith.mulf %318, %330 : vector<2x32xf32>
    %332 = arith.addf %327, %331 : vector<2x32xf32>
    %333 = math.tanh %332 : vector<2x32xf32>
    %334 = arith.subf %308, %333 : vector<2x32xf32>
    %335 = arith.mulf %326, %334 : vector<2x32xf32>
    %336 = arith.addf %333, %335 : vector<2x32xf32>
    %cst_51 = arith.constant dense<0.000000e+00> : vector<2x96xf32>
    %337 = tpu.matmul %336, %244, %cst_51 {dimension_numbers = #tpu.dot_dimension_numbers<[1], [0], [0], [1], [0, 0, 1, 1], [], []>} : vector<2x32xf32>, vector<32x96xf32>, vector<2x96xf32> -> vector<2x96xf32>
    %338 = vector.extract_strided_slice %251 {offsets = [6, 0], sizes = [2, 96], strides = [1, 1]} : vector<16x96xf32> to vector<2x96xf32>
    %339 = vector.extract_strided_slice %338 {offsets = [0, 0], sizes = [2, 32], strides = [1, 1]} : vector<2x96xf32> to vector<2x32xf32>
    %340 = vector.extract_strided_slice %337 {offsets = [0, 0], sizes = [2, 32], strides = [1, 1]} : vector<2x96xf32> to vector<2x32xf32>
    %341 = arith.addf %339, %340 : vector<2x32xf32>
    %342 = arith.negf %341 : vector<2x32xf32>
    %343 = math.exp %342 : vector<2x32xf32>
    %cst_52 = arith.constant 1.000000e+00 : f32
    %344 = vector.broadcast %cst_52 : f32 to vector<2x32xf32>
    %345 = arith.addf %344, %343 : vector<2x32xf32>
    %346 = arith.divf %344, %345 : vector<2x32xf32>
    %347 = vector.extract_strided_slice %338 {offsets = [0, 32], sizes = [2, 32], strides = [1, 1]} : vector<2x96xf32> to vector<2x32xf32>
    %348 = vector.extract_strided_slice %337 {offsets = [0, 32], sizes = [2, 32], strides = [1, 1]} : vector<2x96xf32> to vector<2x32xf32>
    %349 = arith.addf %347, %348 : vector<2x32xf32>
    %350 = arith.negf %349 : vector<2x32xf32>
    %351 = math.exp %350 : vector<2x32xf32>
    %cst_53 = arith.constant 1.000000e+00 : f32
    %352 = vector.broadcast %cst_53 : f32 to vector<2x32xf32>
    %353 = arith.addf %352, %351 : vector<2x32xf32>
    %354 = arith.divf %352, %353 : vector<2x32xf32>
    %355 = vector.extract_strided_slice %338 {offsets = [0, 64], sizes = [2, 32], strides = [1, 1]} : vector<2x96xf32> to vector<2x32xf32>
    %356 = vector.extract_strided_slice %337 {offsets = [0, 64], sizes = [2, 32], strides = [1, 1]} : vector<2x96xf32> to vector<2x32xf32>
    %357 = vector.broadcast %247 : vector<1x32xf32> to vector<2x32xf32>
    %358 = arith.addf %356, %357 : vector<2x32xf32>
    %359 = arith.mulf %346, %358 : vector<2x32xf32>
    %360 = arith.addf %355, %359 : vector<2x32xf32>
    %361 = math.tanh %360 : vector<2x32xf32>
    %362 = arith.subf %336, %361 : vector<2x32xf32>
    %363 = arith.mulf %354, %362 : vector<2x32xf32>
    %364 = arith.addf %361, %363 : vector<2x32xf32>
    %cst_54 = arith.constant dense<0.000000e+00> : vector<2x96xf32>
    %365 = tpu.matmul %364, %244, %cst_54 {dimension_numbers = #tpu.dot_dimension_numbers<[1], [0], [0], [1], [0, 0, 1, 1], [], []>} : vector<2x32xf32>, vector<32x96xf32>, vector<2x96xf32> -> vector<2x96xf32>
    %366 = vector.extract_strided_slice %251 {offsets = [8, 0], sizes = [2, 96], strides = [1, 1]} : vector<16x96xf32> to vector<2x96xf32>
    %367 = vector.extract_strided_slice %366 {offsets = [0, 0], sizes = [2, 32], strides = [1, 1]} : vector<2x96xf32> to vector<2x32xf32>
    %368 = vector.extract_strided_slice %365 {offsets = [0, 0], sizes = [2, 32], strides = [1, 1]} : vector<2x96xf32> to vector<2x32xf32>
    %369 = arith.addf %367, %368 : vector<2x32xf32>
    %370 = arith.negf %369 : vector<2x32xf32>
    %371 = math.exp %370 : vector<2x32xf32>
    %cst_55 = arith.constant 1.000000e+00 : f32
    %372 = vector.broadcast %cst_55 : f32 to vector<2x32xf32>
    %373 = arith.addf %372, %371 : vector<2x32xf32>
    %374 = arith.divf %372, %373 : vector<2x32xf32>
    %375 = vector.extract_strided_slice %366 {offsets = [0, 32], sizes = [2, 32], strides = [1, 1]} : vector<2x96xf32> to vector<2x32xf32>
    %376 = vector.extract_strided_slice %365 {offsets = [0, 32], sizes = [2, 32], strides = [1, 1]} : vector<2x96xf32> to vector<2x32xf32>
    %377 = arith.addf %375, %376 : vector<2x32xf32>
    %378 = arith.negf %377 : vector<2x32xf32>
    %379 = math.exp %378 : vector<2x32xf32>
    %cst_56 = arith.constant 1.000000e+00 : f32
    %380 = vector.broadcast %cst_56 : f32 to vector<2x32xf32>
    %381 = arith.addf %380, %379 : vector<2x32xf32>
    %382 = arith.divf %380, %381 : vector<2x32xf32>
    %383 = vector.extract_strided_slice %366 {offsets = [0, 64], sizes = [2, 32], strides = [1, 1]} : vector<2x96xf32> to vector<2x32xf32>
    %384 = vector.extract_strided_slice %365 {offsets = [0, 64], sizes = [2, 32], strides = [1, 1]} : vector<2x96xf32> to vector<2x32xf32>
    %385 = vector.broadcast %247 : vector<1x32xf32> to vector<2x32xf32>
    %386 = arith.addf %384, %385 : vector<2x32xf32>
    %387 = arith.mulf %374, %386 : vector<2x32xf32>
    %388 = arith.addf %383, %387 : vector<2x32xf32>
    %389 = math.tanh %388 : vector<2x32xf32>
    %390 = arith.subf %364, %389 : vector<2x32xf32>
    %391 = arith.mulf %382, %390 : vector<2x32xf32>
    %392 = arith.addf %389, %391 : vector<2x32xf32>
    %cst_57 = arith.constant dense<0.000000e+00> : vector<2x96xf32>
    %393 = tpu.matmul %392, %244, %cst_57 {dimension_numbers = #tpu.dot_dimension_numbers<[1], [0], [0], [1], [0, 0, 1, 1], [], []>} : vector<2x32xf32>, vector<32x96xf32>, vector<2x96xf32> -> vector<2x96xf32>
    %394 = vector.extract_strided_slice %251 {offsets = [10, 0], sizes = [2, 96], strides = [1, 1]} : vector<16x96xf32> to vector<2x96xf32>
    %395 = vector.extract_strided_slice %394 {offsets = [0, 0], sizes = [2, 32], strides = [1, 1]} : vector<2x96xf32> to vector<2x32xf32>
    %396 = vector.extract_strided_slice %393 {offsets = [0, 0], sizes = [2, 32], strides = [1, 1]} : vector<2x96xf32> to vector<2x32xf32>
    %397 = arith.addf %395, %396 : vector<2x32xf32>
    %398 = arith.negf %397 : vector<2x32xf32>
    %399 = math.exp %398 : vector<2x32xf32>
    %cst_58 = arith.constant 1.000000e+00 : f32
    %400 = vector.broadcast %cst_58 : f32 to vector<2x32xf32>
    %401 = arith.addf %400, %399 : vector<2x32xf32>
    %402 = arith.divf %400, %401 : vector<2x32xf32>
    %403 = vector.extract_strided_slice %394 {offsets = [0, 32], sizes = [2, 32], strides = [1, 1]} : vector<2x96xf32> to vector<2x32xf32>
    %404 = vector.extract_strided_slice %393 {offsets = [0, 32], sizes = [2, 32], strides = [1, 1]} : vector<2x96xf32> to vector<2x32xf32>
    %405 = arith.addf %403, %404 : vector<2x32xf32>
    %406 = arith.negf %405 : vector<2x32xf32>
    %407 = math.exp %406 : vector<2x32xf32>
    %cst_59 = arith.constant 1.000000e+00 : f32
    %408 = vector.broadcast %cst_59 : f32 to vector<2x32xf32>
    %409 = arith.addf %408, %407 : vector<2x32xf32>
    %410 = arith.divf %408, %409 : vector<2x32xf32>
    %411 = vector.extract_strided_slice %394 {offsets = [0, 64], sizes = [2, 32], strides = [1, 1]} : vector<2x96xf32> to vector<2x32xf32>
    %412 = vector.extract_strided_slice %393 {offsets = [0, 64], sizes = [2, 32], strides = [1, 1]} : vector<2x96xf32> to vector<2x32xf32>
    %413 = vector.broadcast %247 : vector<1x32xf32> to vector<2x32xf32>
    %414 = arith.addf %412, %413 : vector<2x32xf32>
    %415 = arith.mulf %402, %414 : vector<2x32xf32>
    %416 = arith.addf %411, %415 : vector<2x32xf32>
    %417 = math.tanh %416 : vector<2x32xf32>
    %418 = arith.subf %392, %417 : vector<2x32xf32>
    %419 = arith.mulf %410, %418 : vector<2x32xf32>
    %420 = arith.addf %417, %419 : vector<2x32xf32>
    %cst_60 = arith.constant dense<0.000000e+00> : vector<2x96xf32>
    %421 = tpu.matmul %420, %244, %cst_60 {dimension_numbers = #tpu.dot_dimension_numbers<[1], [0], [0], [1], [0, 0, 1, 1], [], []>} : vector<2x32xf32>, vector<32x96xf32>, vector<2x96xf32> -> vector<2x96xf32>
    %422 = vector.extract_strided_slice %251 {offsets = [12, 0], sizes = [2, 96], strides = [1, 1]} : vector<16x96xf32> to vector<2x96xf32>
    %423 = vector.extract_strided_slice %422 {offsets = [0, 0], sizes = [2, 32], strides = [1, 1]} : vector<2x96xf32> to vector<2x32xf32>
    %424 = vector.extract_strided_slice %421 {offsets = [0, 0], sizes = [2, 32], strides = [1, 1]} : vector<2x96xf32> to vector<2x32xf32>
    %425 = arith.addf %423, %424 : vector<2x32xf32>
    %426 = arith.negf %425 : vector<2x32xf32>
    %427 = math.exp %426 : vector<2x32xf32>
    %cst_61 = arith.constant 1.000000e+00 : f32
    %428 = vector.broadcast %cst_61 : f32 to vector<2x32xf32>
    %429 = arith.addf %428, %427 : vector<2x32xf32>
    %430 = arith.divf %428, %429 : vector<2x32xf32>
    %431 = vector.extract_strided_slice %422 {offsets = [0, 32], sizes = [2, 32], strides = [1, 1]} : vector<2x96xf32> to vector<2x32xf32>
    %432 = vector.extract_strided_slice %421 {offsets = [0, 32], sizes = [2, 32], strides = [1, 1]} : vector<2x96xf32> to vector<2x32xf32>
    %433 = arith.addf %431, %432 : vector<2x32xf32>
    %434 = arith.negf %433 : vector<2x32xf32>
    %435 = math.exp %434 : vector<2x32xf32>
    %cst_62 = arith.constant 1.000000e+00 : f32
    %436 = vector.broadcast %cst_62 : f32 to vector<2x32xf32>
    %437 = arith.addf %436, %435 : vector<2x32xf32>
    %438 = arith.divf %436, %437 : vector<2x32xf32>
    %439 = vector.extract_strided_slice %422 {offsets = [0, 64], sizes = [2, 32], strides = [1, 1]} : vector<2x96xf32> to vector<2x32xf32>
    %440 = vector.extract_strided_slice %421 {offsets = [0, 64], sizes = [2, 32], strides = [1, 1]} : vector<2x96xf32> to vector<2x32xf32>
    %441 = vector.broadcast %247 : vector<1x32xf32> to vector<2x32xf32>
    %442 = arith.addf %440, %441 : vector<2x32xf32>
    %443 = arith.mulf %430, %442 : vector<2x32xf32>
    %444 = arith.addf %439, %443 : vector<2x32xf32>
    %445 = math.tanh %444 : vector<2x32xf32>
    %446 = arith.subf %420, %445 : vector<2x32xf32>
    %447 = arith.mulf %438, %446 : vector<2x32xf32>
    %448 = arith.addf %445, %447 : vector<2x32xf32>
    %cst_63 = arith.constant dense<0.000000e+00> : vector<2x96xf32>
    %449 = tpu.matmul %448, %244, %cst_63 {dimension_numbers = #tpu.dot_dimension_numbers<[1], [0], [0], [1], [0, 0, 1, 1], [], []>} : vector<2x32xf32>, vector<32x96xf32>, vector<2x96xf32> -> vector<2x96xf32>
    %450 = vector.extract_strided_slice %251 {offsets = [14, 0], sizes = [2, 96], strides = [1, 1]} : vector<16x96xf32> to vector<2x96xf32>
    %451 = vector.extract_strided_slice %450 {offsets = [0, 0], sizes = [2, 32], strides = [1, 1]} : vector<2x96xf32> to vector<2x32xf32>
    %452 = vector.extract_strided_slice %449 {offsets = [0, 0], sizes = [2, 32], strides = [1, 1]} : vector<2x96xf32> to vector<2x32xf32>
    %453 = arith.addf %451, %452 : vector<2x32xf32>
    %454 = arith.negf %453 : vector<2x32xf32>
    %455 = math.exp %454 : vector<2x32xf32>
    %cst_64 = arith.constant 1.000000e+00 : f32
    %456 = vector.broadcast %cst_64 : f32 to vector<2x32xf32>
    %457 = arith.addf %456, %455 : vector<2x32xf32>
    %458 = arith.divf %456, %457 : vector<2x32xf32>
    %459 = vector.extract_strided_slice %450 {offsets = [0, 32], sizes = [2, 32], strides = [1, 1]} : vector<2x96xf32> to vector<2x32xf32>
    %460 = vector.extract_strided_slice %449 {offsets = [0, 32], sizes = [2, 32], strides = [1, 1]} : vector<2x96xf32> to vector<2x32xf32>
    %461 = arith.addf %459, %460 : vector<2x32xf32>
    %462 = arith.negf %461 : vector<2x32xf32>
    %463 = math.exp %462 : vector<2x32xf32>
    %cst_65 = arith.constant 1.000000e+00 : f32
    %464 = vector.broadcast %cst_65 : f32 to vector<2x32xf32>
    %465 = arith.addf %464, %463 : vector<2x32xf32>
    %466 = arith.divf %464, %465 : vector<2x32xf32>
    %467 = vector.extract_strided_slice %450 {offsets = [0, 64], sizes = [2, 32], strides = [1, 1]} : vector<2x96xf32> to vector<2x32xf32>
    %468 = vector.extract_strided_slice %449 {offsets = [0, 64], sizes = [2, 32], strides = [1, 1]} : vector<2x96xf32> to vector<2x32xf32>
    %469 = vector.broadcast %247 : vector<1x32xf32> to vector<2x32xf32>
    %470 = arith.addf %468, %469 : vector<2x32xf32>
    %471 = arith.mulf %458, %470 : vector<2x32xf32>
    %472 = arith.addf %467, %471 : vector<2x32xf32>
    %473 = math.tanh %472 : vector<2x32xf32>
    %474 = arith.subf %448, %473 : vector<2x32xf32>
    %475 = arith.mulf %466, %474 : vector<2x32xf32>
    %476 = arith.addf %473, %475 : vector<2x32xf32>
    %cst_66 = arith.constant dense<0.000000e+00> : vector<2x32xf32>
    %477 = tpu.matmul %476, %0, %cst_66 {dimension_numbers = #tpu.dot_dimension_numbers<[1], [0], [0], [1], [0, 0, 1, 1], [], []>} : vector<2x32xf32>, vector<32x32xf32>, vector<2x32xf32> -> vector<2x32xf32>
    %478 = arith.addf %477, %6 : vector<2x32xf32>
    %cst_67 = arith.constant dense<0.000000e+00> : vector<2xf32>
    %479 = vector.multi_reduction <add>, %478, %cst_67 [1] : vector<2x32xf32> to vector<2xf32>
    %480 = vector.shape_cast %479 : vector<2xf32> to vector<2x1xf32>
    %cst_68 = arith.constant 3.200000e+01 : f32
    %481 = vector.broadcast %cst_68 : f32 to vector<2x1xf32>
    %482 = arith.divf %480, %481 : vector<2x1xf32>
    %483 = vector.broadcast %482 : vector<2x1xf32> to vector<2x32xf32>
    %484 = arith.subf %478, %483 : vector<2x32xf32>
    %485 = arith.mulf %484, %484 : vector<2x32xf32>
    %cst_69 = arith.constant dense<0.000000e+00> : vector<2xf32>
    %486 = vector.multi_reduction <add>, %485, %cst_69 [1] : vector<2x32xf32> to vector<2xf32>
    %487 = vector.shape_cast %486 : vector<2xf32> to vector<2x1xf32>
    %cst_70 = arith.constant 3.200000e+01 : f32
    %488 = vector.broadcast %cst_70 : f32 to vector<2x1xf32>
    %489 = arith.divf %487, %488 : vector<2x1xf32>
    %490 = vector.broadcast %482 : vector<2x1xf32> to vector<2x32xf32>
    %491 = arith.subf %478, %490 : vector<2x32xf32>
    %cst_71 = arith.constant 9.99999974E-6 : f32
    %492 = vector.broadcast %cst_71 : f32 to vector<2x1xf32>
    %493 = arith.addf %489, %492 : vector<2x1xf32>
    %494 = math.rsqrt %493 : vector<2x1xf32>
    %495 = vector.broadcast %494 : vector<2x1xf32> to vector<2x32xf32>
    %496 = arith.mulf %491, %495 : vector<2x32xf32>
    %497 = vector.broadcast %3 : vector<1x32xf32> to vector<2x32xf32>
    %498 = arith.mulf %496, %497 : vector<2x32xf32>
    %499 = vector.broadcast %4 : vector<1x32xf32> to vector<2x32xf32>
    %500 = arith.addf %498, %499 : vector<2x32xf32>
    %cst_72 = arith.constant 0.000000e+00 : f32
    %501 = vector.broadcast %cst_72 : f32 to vector<2x32xf32>
    %502 = arith.maximumf %500, %501 : vector<2x32xf32>
    %c0_73 = arith.constant 0 : index
    %c0_74 = arith.constant 0 : index
    %503 = vector.load %arg5[%c0_73, %c0_74] : memref<35x32xf32, #tpu.memory_space<vmem>>, vector<32x32xf32>
    %c32_75 = arith.constant 32 : index
    %c0_76 = arith.constant 0 : index
    %504 = vector.load %arg5[%c32_75, %c0_76] : memref<35x32xf32, #tpu.memory_space<vmem>>, vector<3x32xf32>
    %505 = vector.extract_strided_slice %504 {offsets = [0, 0], sizes = [1, 32], strides = [1, 1]} : vector<3x32xf32> to vector<1x32xf32>
    %506 = vector.extract_strided_slice %504 {offsets = [1, 0], sizes = [1, 32], strides = [1, 1]} : vector<3x32xf32> to vector<1x32xf32>
    %507 = vector.extract_strided_slice %504 {offsets = [2, 0], sizes = [1, 32], strides = [1, 1]} : vector<3x32xf32> to vector<1x32xf32>
    %cst_77 = arith.constant dense<0.000000e+00> : vector<2x32xf32>
    %508 = tpu.matmul %502, %503, %cst_77 {dimension_numbers = #tpu.dot_dimension_numbers<[1], [0], [0], [1], [0, 0, 1, 1], [], []>} : vector<2x32xf32>, vector<32x32xf32>, vector<2x32xf32> -> vector<2x32xf32>
    %509 = vector.broadcast %505 : vector<1x32xf32> to vector<2x32xf32>
    %510 = arith.addf %508, %509 : vector<2x32xf32>
    %cst_78 = arith.constant dense<0.000000e+00> : vector<2xf32>
    %511 = vector.multi_reduction <add>, %510, %cst_78 [1] : vector<2x32xf32> to vector<2xf32>
    %512 = vector.shape_cast %511 : vector<2xf32> to vector<2x1xf32>
    %cst_79 = arith.constant 3.200000e+01 : f32
    %513 = vector.broadcast %cst_79 : f32 to vector<2x1xf32>
    %514 = arith.divf %512, %513 : vector<2x1xf32>
    %515 = vector.broadcast %514 : vector<2x1xf32> to vector<2x32xf32>
    %516 = arith.subf %510, %515 : vector<2x32xf32>
    %517 = arith.mulf %516, %516 : vector<2x32xf32>
    %cst_80 = arith.constant dense<0.000000e+00> : vector<2xf32>
    %518 = vector.multi_reduction <add>, %517, %cst_80 [1] : vector<2x32xf32> to vector<2xf32>
    %519 = vector.shape_cast %518 : vector<2xf32> to vector<2x1xf32>
    %cst_81 = arith.constant 3.200000e+01 : f32
    %520 = vector.broadcast %cst_81 : f32 to vector<2x1xf32>
    %521 = arith.divf %519, %520 : vector<2x1xf32>
    %522 = vector.broadcast %514 : vector<2x1xf32> to vector<2x32xf32>
    %523 = arith.subf %510, %522 : vector<2x32xf32>
    %cst_82 = arith.constant 9.99999974E-6 : f32
    %524 = vector.broadcast %cst_82 : f32 to vector<2x1xf32>
    %525 = arith.addf %521, %524 : vector<2x1xf32>
    %526 = math.rsqrt %525 : vector<2x1xf32>
    %527 = vector.broadcast %526 : vector<2x1xf32> to vector<2x32xf32>
    %528 = arith.mulf %523, %527 : vector<2x32xf32>
    %529 = vector.broadcast %506 : vector<1x32xf32> to vector<2x32xf32>
    %530 = arith.mulf %528, %529 : vector<2x32xf32>
    %531 = vector.broadcast %507 : vector<1x32xf32> to vector<2x32xf32>
    %532 = arith.addf %530, %531 : vector<2x32xf32>
    %cst_83 = arith.constant 0.000000e+00 : f32
    %533 = vector.broadcast %cst_83 : f32 to vector<2x32xf32>
    %534 = arith.maximumf %532, %533 : vector<2x32xf32>
    %c0_84 = arith.constant 0 : index
    %c0_85 = arith.constant 0 : index
    %535 = vector.load %arg6[%c0_84, %c0_85] : memref<33x1xf32, #tpu.memory_space<vmem>>, vector<32x1xf32>
    %c32_86 = arith.constant 32 : index
    %c0_87 = arith.constant 0 : index
    %536 = vector.load %arg6[%c32_86, %c0_87] : memref<33x1xf32, #tpu.memory_space<vmem>>, vector<1x1xf32>
    %cst_88 = arith.constant dense<0.000000e+00> : vector<2x1xf32>
    %537 = tpu.matmul %534, %535, %cst_88 {dimension_numbers = #tpu.dot_dimension_numbers<[1], [0], [0], [1], [0, 0, 1, 1], [], []>} : vector<2x32xf32>, vector<32x1xf32>, vector<2x1xf32> -> vector<2x1xf32>
    %538 = vector.broadcast %536 : vector<1x1xf32> to vector<2x1xf32>
    %539 = arith.addf %537, %538 : vector<2x1xf32>
    %c0_89 = arith.constant 0 : index
    %c0_90 = arith.constant 0 : index
    %540 = vector.load %arg7[%c0_89, %c0_90] : memref<2x1xf32, #tpu.memory_space<vmem>>, vector<2x1xf32>
    tpu.vector_store %arg7[%c0_89, %c0_90], %539 {strides = array<i32>} : memref<2x1xf32, #tpu.memory_space<vmem>>, vector<2x1xf32>,
    return
  }
}

</mosaic_0001>

<llo_original>
// kernel: tpu_custom_call.1
$region0: #{tpu_custom_call.1}
  #allocation0 [shape = 'u32[]', space=smem, size = 0x4, offset = 0x4, fixed_abs, tag = 'smem constant byte address 0x4 - core index']
  #allocation1 [shape = 'u32[144,128]{1,0:T(1,128)}', space=vmem, size = 0x12000, scoped, tag = 'internal scratch']
  %s0 = inlined_call_operand.vmem [shape: f32[16,1], index: 0, kind: input, shape index: {}]
  %s1 = inlined_call_operand.vmem [shape: f32[2,7], index: 1, kind: input, shape index: {}]
  %s2 = inlined_call_operand.vmem [shape: f32[42,96], index: 2, kind: input, shape index: {}]
  %s3 = inlined_call_operand.vmem [shape: f32[66,96], index: 3, kind: input, shape index: {}]
  %s4 = inlined_call_operand.vmem [shape: f32[41,32], index: 4, kind: input, shape index: {}]
  %s5 = inlined_call_operand.vmem [shape: f32[35,32], index: 5, kind: input, shape index: {}]
  %s6 = inlined_call_operand.vmem [shape: f32[33,1], index: 6, kind: input, shape index: {}]
  %s7 = inlined_call_operand.vmem [shape: f32[2,1], index: 7, kind: output, shape index: {}]
  %s8 = sld [smem:[#allocation0]]
  $region38: #{tpu_custom_call.1} parent=0
    _
  %s10 = ssub.s32 1, %s8
  %s11 = scalar_select 0, %s10, %s8
  // Predicated region
  $region2: #{tpu_custom_call.1} parent=0 // pred_check
    _
  $region3: #{tpu_custom_call.1} parent=0 // pred_check_branch
    %13 = sbr.rel (0) target = $region5
  $region4: #{tpu_custom_call.1} parent=0 // pred_region
    _
  $region5: #{tpu_custom_call.1} parent=0 // pred_fallthru
    _
  // Predicated region
  $region6: #{tpu_custom_call.1} parent=0 // pred_check
    _
  $region7: #{tpu_custom_call.1} parent=0 // pred_check_branch
    %15 = sbr.rel (0) target = $region9
  $region8: #{tpu_custom_call.1} parent=0 // pred_region
    _
  $region9: #{tpu_custom_call.1} parent=0 // pred_fallthru
    _
  // Predicated region
  $region10: #{tpu_custom_call.1} parent=0 // pred_check
    _
  $region11: #{tpu_custom_call.1} parent=0 // pred_check_branch
    %17 = sbr.rel (0) target = $region13
  $region12: #{tpu_custom_call.1} parent=0 // pred_region
    _
  $region13: #{tpu_custom_call.1} parent=0 // pred_fallthru
    _
  // Predicated region
  $region14: #{tpu_custom_call.1} parent=0 // pred_check
    _
  $region15: #{tpu_custom_call.1} parent=0 // pred_check_branch
    %19 = sbr.rel (0) target = $region17
  $region16: #{tpu_custom_call.1} parent=0 // pred_region
    _
  $region17: #{tpu_custom_call.1} parent=0 // pred_fallthru
    _
  // Predicated region
  $region18: #{tpu_custom_call.1} parent=0 // pred_check
    _
  $region19: #{tpu_custom_call.1} parent=0 // pred_check_branch
    %21 = sbr.rel (0) target = $region21
  $region20: #{tpu_custom_call.1} parent=0 // pred_region
    _
  $region21: #{tpu_custom_call.1} parent=0 // pred_fallthru
    _
  // Predicated region
  $region22: #{tpu_custom_call.1} parent=0 // pred_check
    _
  $region23: #{tpu_custom_call.1} parent=0 // pred_check_branch
    %23 = sbr.rel (0) target = $region25
  $region24: #{tpu_custom_call.1} parent=0 // pred_region
    _
  $region25: #{tpu_custom_call.1} parent=0 // pred_fallthru
    _
  // Predicated region
  $region26: #{tpu_custom_call.1} parent=0 // pred_check
    _
  $region27: #{tpu_custom_call.1} parent=0 // pred_check_branch
    %25 = sbr.rel (0) target = $region29
  $region28: #{tpu_custom_call.1} parent=0 // pred_region
    _
  $region29: #{tpu_custom_call.1} parent=0 // pred_fallthru
    _
  %v26 = vld [vmem:[%s4] sm:$0xff]
  %v27 = vld [vmem:[%s4 + $0x8] sm:$0xff]
  %v28 = vld [vmem:[%s4 + $0x10] sm:$0xff]
  %v29 = vld [vmem:[%s4 + $0x18] sm:$0xff]
  %v30 = vld [vmem:[%s4 + $0x20] sm:$0xff]
  %v31 = vld [vmem:[%s4 + $0x28] sm:$0x1]
  %v32 = vld [vmem:[%s1] sm:$0x3]
  %vm33 = vcmask 56320
  %v35 = vsel %vm33, %v32, 0
  %vm37 = vcmask 1046528
  %v39 = vsel %vm37, %v30, 0
  %41 = vmatprep.subr.mxu0 0.0
  %42 = vmatpush1.msra.mxu0 %v39
  %43 = vmatprep.subr.mxu0 0.0
  %44 = vmatpush1.msra.mxu0 0.0
  %45 = vmatprep.subr.mxu0 0.0
  %46 = vmatpush1.msra.mxu0 0.0
  %47 = vmatprep.subr.mxu0 0.0
  %48 = vmatpush1.msra.mxu0 0.0
  %49 = vmatprep.subr.mxu0 0.0
  %50 = vmatpush1.msra.mxu0 0.0
  %51 = vmatprep.subr.mxu0 0.0
  %52 = vmatpush1.msra.mxu0 0.0
  %53 = vmatprep.subr.mxu0 0.0
  %54 = vmatpush1.msra.mxu0 0.0
  %55 = vmatprep.subr.mxu0 0.0
  %56 = vmatpush1.msra.mxu0 0.0
  %57 = vmatprep.subr.mxu0 0.0
  %58 = vmatpush1.msra.mxu0 0.0
  %59 = vmatprep.subr.mxu0 0.0
  %60 = vmatpush1.msra.mxu0 0.0
  %61 = vmatprep.subr.mxu0 0.0
  %62 = vmatpush1.msra.mxu0 0.0
  %63 = vmatprep.subr.mxu0 0.0
  %64 = vmatpush1.msra.mxu0 0.0
  %65 = vmatprep.subr.mxu0 0.0
  %66 = vmatpush1.msra.mxu0 0.0
  %67 = vmatprep.subr.mxu0 0.0
  %68 = vmatpush1.msra.mxu0 0.0
  %69 = vmatprep.subr.mxu0 0.0
  %70 = vmatpush1.msra.mxu0 0.0
  %71 = vmatprep.subr.mxu0 0.0
  %72 = vmatpush1.msra.mxu0 0.0
  %73 = vmatprep.subr.mxu0 0.0
  %74 = vmatpush1.msra.mxu0 0.0
  %75 = vmatprep.subr.mxu0 0.0
  %76 = vmatpush1.msra.mxu0 0.0
  %77 = vmatprep.subr.mxu0 0.0
  %78 = vmatpush1.msra.mxu0 0.0
  %79 = vmatprep.subr.mxu0 0.0
  %80 = vmatpush1.msra.mxu0 0.0
  %81 = vmatprep.subr.mxu0 0.0
  %82 = vmatpush1.msra.mxu0 0.0
  %83 = vmatprep.subr.mxu0 0.0
  %84 = vmatpush1.msra.mxu0 0.0
  %85 = vmatprep.subr.mxu0 0.0
  %86 = vmatpush1.msra.mxu0 0.0
  %87 = vmatprep.subr.mxu0 0.0
  %88 = vmatpush1.msra.mxu0 0.0
  %89 = vmatprep.subr.mxu0 0.0
  %90 = vmatpush1.msra.mxu0 0.0
  %91 = vmatprep.subr.mxu0 0.0
  %92 = vmatpush1.msra.mxu0 0.0
  %93 = vmatprep.subr.mxu0 0.0
  %94 = vmatpush1.msra.mxu0 0.0
  %95 = vmatprep.subr.mxu0 0.0
  %96 = vmatpush1.msra.mxu0 0.0
  %97 = vmatprep.subr.mxu0 0.0
  %98 = vmatpush1.msra.mxu0 0.0
  %99 = vmatprep.subr.mxu0 0.0
  %100 = vmatpush1.msra.mxu0 0.0
  %101 = vmatprep.subr.mxu0 0.0
  %102 = vmatpush1.msra.mxu0 0.0
  %103 = vmatprep.subr.mxu0 0.0
  %104 = vmatpush1.msra.mxu0 0.0
  %105 = vmatprep.mubr.f32.mxu0 0.0
  %106 = vmatmul.mubr.f32.gmra.mrb[0].mxu0 %v35
  %v107 = vpop.f32.mrb[0].mxu0
  %v108 = vadd.f32 0.0, %v107
  %v109 = vpop.f32.mrb[0].mxu0
  %110 = vdwg.mxu0
  %v111 = vld [vmem:[%s0] sm:$0xff]
  %v112 = vld [vmem:[%s0 + $0x8] sm:$0xff]
  %v113 = vld [vmem:[%s2 + $0x8] sm:$0xff]
  %v114 = vld [vmem:[%s2 + $0x10] sm:$0xff]
  %v115 = vld [vmem:[%s2 + $0x18] sm:$0xff]
  %v116 = vld [vmem:[%s2 + $0x20] sm:$0xff]
  %v117 = vld [vmem:[%s2 + $0x28] sm:$0x3]
  %v118 = vld [vmem:[%s2] sm:$0x1]
  %120 = vset.pattern.permute.xlu0 0
  %121 = vperm.xlu0 %120, %v111
  %v122 = vpop.permute.xlu0 %121
  %125 = vset.pattern.permute.xlu0 0
  %126 = vperm.xlu0 %125, %v112
  %v127 = vpop.permute.xlu0 %126
  %v129 = vlaneseq
  %v130 = vshrl.u32 %v129, 7
  %v131 = vsub.s32 0, %v130
  %v132 = vrot.slane %v118, %v131
  %v133 = vmul.f32 %v122, %v132
  %v134 = vmul.f32 %v127, %v132
  %v135 = vlaneseq
  %v136 = vshrl.u32 %v135, 7
  %v137 = vsub.s32 0, %v136
  %v138 = vrot.slane %v117, %v137
  %v139 = vadd.f32 %v133, %v138
  %v140 = vadd.f32 %v134, %v138
  %vm141 = vcmask 261120
  %v143 = vsel %vm141, 0.0, 0
  %145 = vmatprep.subr.mxu0 0.0
  %146 = vmatpush1.msra.mxu0 %v113
  %147 = vmatprep.subr.mxu0 0.0
  %148 = vmatpush1.msra.mxu0 %v114
  %149 = vmatprep.subr.mxu0 0.0
  %150 = vmatpush1.msra.mxu0 %v115
  %151 = vmatprep.subr.mxu0 0.0
  %152 = vmatpush1.msra.mxu0 %v116
  %153 = vmatprep.subr.mxu0 0.0
  %154 = vmatpush1.msra.mxu0 0.0
  %155 = vmatprep.subr.mxu0 0.0
  %156 = vmatpush1.msra.mxu0 0.0
  %157 = vmatprep.subr.mxu0 0.0
  %158 = vmatpush1.msra.mxu0 0.0
  %159 = vmatprep.subr.mxu0 0.0
  %160 = vmatpush1.msra.mxu0 0.0
  %161 = vmatprep.subr.mxu0 0.0
  %162 = vmatpush1.msra.mxu0 0.0
  %163 = vmatprep.subr.mxu0 0.0
  %164 = vmatpush1.msra.mxu0 0.0
  %165 = vmatprep.subr.mxu0 0.0
  %166 = vmatpush1.msra.mxu0 0.0
  %167 = vmatprep.subr.mxu0 0.0
  %168 = vmatpush1.msra.mxu0 0.0
  %169 = vmatprep.subr.mxu0 0.0
  %170 = vmatpush1.msra.mxu0 0.0
  %171 = vmatprep.subr.mxu0 0.0
  %172 = vmatpush1.msra.mxu0 0.0
  %173 = vmatprep.subr.mxu0 0.0
  %174 = vmatpush1.msra.mxu0 0.0
  %175 = vmatprep.subr.mxu0 0.0
  %176 = vmatpush1.msra.mxu0 0.0
  %177 = vmatprep.subr.mxu0 0.0
  %178 = vmatpush1.msra.mxu0 0.0
  %179 = vmatprep.subr.mxu0 0.0
  %180 = vmatpush1.msra.mxu0 0.0
  %181 = vmatprep.subr.mxu0 0.0
  %182 = vmatpush1.msra.mxu0 0.0
  %183 = vmatprep.subr.mxu0 0.0
  %184 = vmatpush1.msra.mxu0 0.0
  %185 = vmatprep.subr.mxu0 0.0
  %186 = vmatpush1.msra.mxu0 0.0
  %187 = vmatprep.subr.mxu0 0.0
  %188 = vmatpush1.msra.mxu0 0.0
  %189 = vmatprep.subr.mxu0 0.0
  %190 = vmatpush1.msra.mxu0 0.0
  %191 = vmatprep.subr.mxu0 0.0
  %192 = vmatpush1.msra.mxu0 0.0
  %193 = vmatprep.subr.mxu0 0.0
  %194 = vmatpush1.msra.mxu0 0.0
  %195 = vmatprep.subr.mxu0 0.0
  %196 = vmatpush1.msra.mxu0 0.0
  %197 = vmatprep.subr.mxu0 0.0
  %198 = vmatpush1.msra.mxu0 0.0
  %199 = vmatprep.subr.mxu0 0.0
  %200 = vmatpush1.msra.mxu0 0.0
  %201 = vmatprep.subr.mxu0 0.0
  %202 = vmatpush1.msra.mxu0 0.0
  %203 = vmatprep.subr.mxu0 0.0
  %204 = vmatpush1.msra.mxu0 0.0
  %205 = vmatprep.subr.mxu0 0.0
  %206 = vmatpush1.msra.mxu0 0.0
  %207 = vmatprep.subr.mxu0 0.0
  %208 = vmatpush1.msra.mxu0 0.0
  %209 = vmatprep.mubr.f32.mxu0 0.0
  %210 = vmatmul.mubr.f32.gmra.mrb[0].mxu0 %v143
  %v211 = vpop.f32.mrb[0].mxu0
  %v212 = vadd.f32 0.0, %v211
  %v213 = vpop.f32.mrb[0].mxu0
  %214 = vdwg.mxu0
  %v215 = vadd.f32 %v139, %v212
  %v216 = vxor.u32 %v215, 2147483648
  %v217 = vmul.f32 %v216, 1.442695
  %v218 = vpow.pop %v217
  %v219 = vadd.f32 %v218, 1.0
  %v220 = vrcp.pop %v219
  %v221 = vmul.f32 1.0, %v220
  %v222 = vlaneseq
  %v223 = vshrl.u32 %v222, 7
  %v224 = vsub.s32 1, %v223
  %v225 = vrot.slane %v117, %v224
  %v226 = vadd.f32 %v212, %v225
  %228 = vrot.lane.b32.xlu0 %v226, 64
  %v229 = vpop.permute.xlu0 %228
  %v231 = vmul.f32 %v221, %v229
  %233 = vrot.lane.b32.xlu0 %v231, 64
  %v234 = vpop.permute.xlu0 %233
  %v236 = vadd.f32 %v139, %v234
  %v237 = vtanh.pop %v236
  %v238 = vsub.f32 0.0, %v237
  %240 = vrot.lane.b32.xlu0 %v238, 96
  %v241 = vpop.permute.xlu0 %240
  %v243 = vmul.f32 %v221, %v241
  %245 = vrot.lane.b32.xlu0 %v243, 32
  %v246 = vpop.permute.xlu0 %245
  %v248 = vadd.f32 %v237, %v246
  %250 = vrot.lane.b32.xlu0 %v248, 64
  %v251 = vpop.permute.xlu0 %250
  %v252 = vsel %vm141, %v251, 0
  %254 = vmatprep.subr.mxu0 0.0
  %255 = vmatpush1.msra.mxu0 %v113
  %256 = vmatprep.subr.mxu0 0.0
  %257 = vmatpush1.msra.mxu0 %v114
  %258 = vmatprep.subr.mxu0 0.0
  %259 = vmatpush1.msra.mxu0 %v115
  %260 = vmatprep.subr.mxu0 0.0
  %261 = vmatpush1.msra.mxu0 %v116
  %262 = vmatprep.subr.mxu0 0.0
  %263 = vmatpush1.msra.mxu0 0.0
  %264 = vmatprep.subr.mxu0 0.0
  %265 = vmatpush1.msra.mxu0 0.0
  %266 = vmatprep.subr.mxu0 0.0
  %267 = vmatpush1.msra.mxu0 0.0
  %268 = vmatprep.subr.mxu0 0.0
  %269 = vmatpush1.msra.mxu0 0.0
  %270 = vmatprep.subr.mxu0 0.0
  %271 = vmatpush1.msra.mxu0 0.0
  %272 = vmatprep.subr.mxu0 0.0
  %273 = vmatpush1.msra.mxu0 0.0
  %274 = vmatprep.subr.mxu0 0.0
  %275 = vmatpush1.msra.mxu0 0.0
  %276 = vmatprep.subr.mxu0 0.0
  %277 = vmatpush1.msra.mxu0 0.0
  %278 = vmatprep.subr.mxu0 0.0
  %279 = vmatpush1.msra.mxu0 0.0
  %280 = vmatprep.subr.mxu0 0.0
  %281 = vmatpush1.msra.mxu0 0.0
  %282 = vmatprep.subr.mxu0 0.0
  %283 = vmatpush1.msra.mxu0 0.0
  %284 = vmatprep.subr.mxu0 0.0
  %285 = vmatpush1.msra.mxu0 0.0
  %286 = vmatprep.subr.mxu0 0.0
  %287 = vmatpush1.msra.mxu0 0.0
  %288 = vmatprep.subr.mxu0 0.0
  %289 = vmatpush1.msra.mxu0 0.0
  %290 = vmatprep.subr.mxu0 0.0
  %291 = vmatpush1.msra.mxu0 0.0
  %292 = vmatprep.subr.mxu0 0.0
  %293 = vmatpush1.msra.mxu0 0.0
  %294 = vmatprep.subr.mxu0 0.0
  %295 = vmatpush1.msra.mxu0 0.0
  %296 = vmatprep.subr.mxu0 0.0
  %297 = vmatpush1.msra.mxu0 0.0
  %298 = vmatprep.subr.mxu0 0.0
  %299 = vmatpush1.msra.mxu0 0.0
  %300 = vmatprep.subr.mxu0 0.0
  %301 = vmatpush1.msra.mxu0 0.0
  %302 = vmatprep.subr.mxu0 0.0
  %303 = vmatpush1.msra.mxu0 0.0
  %304 = vmatprep.subr.mxu0 0.0
  %305 = vmatpush1.msra.mxu0 0.0
  %306 = vmatprep.subr.mxu0 0.0
  %307 = vmatpush1.msra.mxu0 0.0
  %308 = vmatprep.subr.mxu0 0.0
  %309 = vmatpush1.msra.mxu0 0.0
  %310 = vmatprep.subr.mxu0 0.0
  %311 = vmatpush1.msra.mxu0 0.0
  %312 = vmatprep.subr.mxu0 0.0
  %313 = vmatpush1.msra.mxu0 0.0
  %314 = vmatprep.subr.mxu0 0.0
  %315 = vmatpush1.msra.mxu0 0.0
  %316 = vmatprep.subr.mxu0 0.0
  %317 = vmatpush1.msra.mxu0 0.0
  %318 = vmatprep.mubr.f32.mxu0 0.0
  %319 = vmatmul.mubr.f32.gmra.mrb[0].mxu0 %v252
  %v320 = vpop.f32.mrb[0].mxu0
  %v321 = vadd.f32 0.0, %v320
  %v322 = vpop.f32.mrb[0].mxu0
  %323 = vdwg.mxu0
  %v325 = vrot.slane %v321, 6
  %v327 = vadd.f32 %v139, %v325
  %v328 = vxor.u32 %v327, 2147483648
  %v329 = vmul.f32 %v328, 1.442695
  %v330 = vpow.pop %v329
  %v331 = vadd.f32 %v330, 1.0
  %v332 = vrcp.pop %v331
  %v333 = vmul.f32 1.0, %v332
  %v334 = vadd.f32 %v321, %v225
  %v336 = vrot.slane %v334, 6
  %337 = vrot.lane.b32.xlu0 %v336, 64
  %v338 = vpop.permute.xlu0 %337
  %v340 = vmul.f32 %v333, %v338
  %342 = vrot.lane.b32.xlu0 %v340, 64
  %v343 = vpop.permute.xlu0 %342
  %v345 = vadd.f32 %v139, %v343
  %v346 = vtanh.pop %v345
  %v348 = vrot.slane %v346, 2
  %v350 = vsub.f32 %v248, %v348
  %v352 = vrot.slane %v350, 6
  %353 = vrot.lane.b32.xlu0 %v352, 96
  %v354 = vpop.permute.xlu0 %353
  %v356 = vmul.f32 %v333, %v354
  %358 = vrot.lane.b32.xlu0 %v356, 32
  %v359 = vpop.permute.xlu0 %358
  %v361 = vadd.f32 %v346, %v359
  %v363 = vrot.slane %v361, 2
  %364 = vrot.lane.b32.xlu0 %v363, 64
  %v365 = vpop.permute.xlu0 %364
  %v366 = vsel %vm141, %v365, 0
  %368 = vmatprep.subr.mxu0 0.0
  %369 = vmatpush1.msra.mxu0 %v113
  %370 = vmatprep.subr.mxu0 0.0
  %371 = vmatpush1.msra.mxu0 %v114
  %372 = vmatprep.subr.mxu0 0.0
  %373 = vmatpush1.msra.mxu0 %v115
  %374 = vmatprep.subr.mxu0 0.0
  %375 = vmatpush1.msra.mxu0 %v116
  %376 = vmatprep.subr.mxu0 0.0
  %377 = vmatpush1.msra.mxu0 0.0
  %378 = vmatprep.subr.mxu0 0.0
  %379 = vmatpush1.msra.mxu0 0.0
  %380 = vmatprep.subr.mxu0 0.0
  %381 = vmatpush1.msra.mxu0 0.0
  %382 = vmatprep.subr.mxu0 0.0
  %383 = vmatpush1.msra.mxu0 0.0
  %384 = vmatprep.subr.mxu0 0.0
  %385 = vmatpush1.msra.mxu0 0.0
  %386 = vmatprep.subr.mxu0 0.0
  %387 = vmatpush1.msra.mxu0 0.0
  %388 = vmatprep.subr.mxu0 0.0
  %389 = vmatpush1.msra.mxu0 0.0
  %390 = vmatprep.subr.mxu0 0.0
  %391 = vmatpush1.msra.mxu0 0.0
  %392 = vmatprep.subr.mxu0 0.0
  %393 = vmatpush1.msra.mxu0 0.0
  %394 = vmatprep.subr.mxu0 0.0
  %395 = vmatpush1.msra.mxu0 0.0
  %396 = vmatprep.subr.mxu0 0.0
  %397 = vmatpush1.msra.mxu0 0.0
  %398 = vmatprep.subr.mxu0 0.0
  %399 = vmatpush1.msra.mxu0 0.0
  %400 = vmatprep.subr.mxu0 0.0
  %401 = vmatpush1.msra.mxu0 0.0
  %402 = vmatprep.subr.mxu0 0.0
  %403 = vmatpush1.msra.mxu0 0.0
  %404 = vmatprep.subr.mxu0 0.0
  %405 = vmatpush1.msra.mxu0 0.0
  %406 = vmatprep.subr.mxu0 0.0
  %407 = vmatpush1.msra.mxu0 0.0
  %408 = vmatprep.subr.mxu0 0.0
  %409 = vmatpush1.msra.mxu0 0.0
  %410 = vmatprep.subr.mxu0 0.0
  %411 = vmatpush1.msra.mxu0 0.0
  %412 = vmatprep.subr.mxu0 0.0
  %413 = vmatpush1.msra.mxu0 0.0
  %414 = vmatprep.subr.mxu0 0.0
  %415 = vmatpush1.msra.mxu0 0.0
  %416 = vmatprep.subr.mxu0 0.0
  %417 = vmatpush1.msra.mxu0 0.0
  %418 = vmatprep.subr.mxu0 0.0
  %419 = vmatpush1.msra.mxu0 0.0
  %420 = vmatprep.subr.mxu0 0.0
  %421 = vmatpush1.msra.mxu0 0.0
  %422 = vmatprep.subr.mxu0 0.0
  %423 = vmatpush1.msra.mxu0 0.0
  %424 = vmatprep.subr.mxu0 0.0
  %425 = vmatpush1.msra.mxu0 0.0
  %426 = vmatprep.subr.mxu0 0.0
  %427 = vmatpush1.msra.mxu0 0.0
  %428 = vmatprep.subr.mxu0 0.0
  %429 = vmatpush1.msra.mxu0 0.0
  %430 = vmatprep.subr.mxu0 0.0
  %431 = vmatpush1.msra.mxu0 0.0
  %432 = vmatprep.mubr.f32.mxu0 0.0
  %433 = vmatmul.mubr.f32.gmra.mrb[0].mxu0 %v366
  %v434 = vpop.f32.mrb[0].mxu0
  %v435 = vadd.f32 0.0, %v434
  %v436 = vpop.f32.mrb[0].mxu0
  %437 = vdwg.mxu0
  %v439 = vrot.slane %v435, 4
  %v441 = vadd.f32 %v139, %v439
  %v442 = vxor.u32 %v441, 2147483648
  %v443 = vmul.f32 %v442, 1.442695
  %v444 = vpow.pop %v443
  %v445 = vadd.f32 %v444, 1.0
  %v446 = vrcp.pop %v445
  %v447 = vmul.f32 1.0, %v446
  %v448 = vadd.f32 %v435, %v225
  %v450 = vrot.slane %v448, 4
  %451 = vrot.lane.b32.xlu0 %v450, 64
  %v452 = vpop.permute.xlu0 %451
  %v454 = vmul.f32 %v447, %v452
  %456 = vrot.lane.b32.xlu0 %v454, 64
  %v457 = vpop.permute.xlu0 %456
  %v459 = vadd.f32 %v139, %v457
  %v460 = vtanh.pop %v459
  %v462 = vrot.slane %v460, 2
  %v464 = vsub.f32 %v361, %v462
  %v466 = vrot.slane %v464, 6
  %467 = vrot.lane.b32.xlu0 %v466, 96
  %v468 = vpop.permute.xlu0 %467
  %v470 = vmul.f32 %v447, %v468
  %472 = vrot.lane.b32.xlu0 %v470, 32
  %v473 = vpop.permute.xlu0 %472
  %v475 = vadd.f32 %v460, %v473
  %v477 = vrot.slane %v475, 4
  %478 = vrot.lane.b32.xlu0 %v477, 64
  %v479 = vpop.permute.xlu0 %478
  %v480 = vsel %vm141, %v479, 0
  %482 = vmatprep.subr.mxu0 0.0
  %483 = vmatpush1.msra.mxu0 %v113
  %484 = vmatprep.subr.mxu0 0.0
  %485 = vmatpush1.msra.mxu0 %v114
  %486 = vmatprep.subr.mxu0 0.0
  %487 = vmatpush1.msra.mxu0 %v115
  %488 = vmatprep.subr.mxu0 0.0
  %489 = vmatpush1.msra.mxu0 %v116
  %490 = vmatprep.subr.mxu0 0.0
  %491 = vmatpush1.msra.mxu0 0.0
  %492 = vmatprep.subr.mxu0 0.0
  %493 = vmatpush1.msra.mxu0 0.0
  %494 = vmatprep.subr.mxu0 0.0
  %495 = vmatpush1.msra.mxu0 0.0
  %496 = vmatprep.subr.mxu0 0.0
  %497 = vmatpush1.msra.mxu0 0.0
  %498 = vmatprep.subr.mxu0 0.0
  %499 = vmatpush1.msra.mxu0 0.0
  %500 = vmatprep.subr.mxu0 0.0
  %501 = vmatpush1.msra.mxu0 0.0
  %502 = vmatprep.subr.mxu0 0.0
  %503 = vmatpush1.msra.mxu0 0.0
  %504 = vmatprep.subr.mxu0 0.0
  %505 = vmatpush1.msra.mxu0 0.0
  %506 = vmatprep.subr.mxu0 0.0
  %507 = vmatpush1.msra.mxu0 0.0
  %508 = vmatprep.subr.mxu0 0.0
  %509 = vmatpush1.msra.mxu0 0.0
  %510 = vmatprep.subr.mxu0 0.0
  %511 = vmatpush1.msra.mxu0 0.0
  %512 = vmatprep.subr.mxu0 0.0
  %513 = vmatpush1.msra.mxu0 0.0
  %514 = vmatprep.subr.mxu0 0.0
  %515 = vmatpush1.msra.mxu0 0.0
  %516 = vmatprep.subr.mxu0 0.0
  %517 = vmatpush1.msra.mxu0 0.0
  %518 = vmatprep.subr.mxu0 0.0
  %519 = vmatpush1.msra.mxu0 0.0
  %520 = vmatprep.subr.mxu0 0.0
  %521 = vmatpush1.msra.mxu0 0.0
  %522 = vmatprep.subr.mxu0 0.0
  %523 = vmatpush1.msra.mxu0 0.0
  %524 = vmatprep.subr.mxu0 0.0
  %525 = vmatpush1.msra.mxu0 0.0
  %526 = vmatprep.subr.mxu0 0.0
  %527 = vmatpush1.msra.mxu0 0.0
  %528 = vmatprep.subr.mxu0 0.0
  %529 = vmatpush1.msra.mxu0 0.0
  %530 = vmatprep.subr.mxu0 0.0
  %531 = vmatpush1.msra.mxu0 0.0
  %532 = vmatprep.subr.mxu0 0.0
  %533 = vmatpush1.msra.mxu0 0.0
  %534 = vmatprep.subr.mxu0 0.0
  %535 = vmatpush1.msra.mxu0 0.0
  %536 = vmatprep.subr.mxu0 0.0
  %537 = vmatpush1.msra.mxu0 0.0
  %538 = vmatprep.subr.mxu0 0.0
  %539 = vmatpush1.msra.mxu0 0.0
  %540 = vmatprep.subr.mxu0 0.0
  %541 = vmatpush1.msra.mxu0 0.0
  %542 = vmatprep.subr.mxu0 0.0
  %543 = vmatpush1.msra.mxu0 0.0
  %544 = vmatprep.subr.mxu0 0.0
  %545 = vmatpush1.msra.mxu0 0.0
  %546 = vmatprep.mubr.f32.mxu0 0.0
  %547 = vmatmul.mubr.f32.gmra.mrb[0].mxu0 %v480
  %v548 = vpop.f32.mrb[0].mxu0
  %v549 = vadd.f32 0.0, %v548
  %v550 = vpop.f32.mrb[0].mxu0
  %551 = vdwg.mxu0
  %v553 = vrot.slane %v549, 2
  %v555 = vadd.f32 %v139, %v553
  %v556 = vxor.u32 %v555, 2147483648
  %v557 = vmul.f32 %v556, 1.442695
  %v558 = vpow.pop %v557
  %v559 = vadd.f32 %v558, 1.0
  %v560 = vrcp.pop %v559
  %v561 = vmul.f32 1.0, %v560
  %v562 = vadd.f32 %v549, %v225
  %v564 = vrot.slane %v562, 2
  %565 = vrot.lane.b32.xlu0 %v564, 64
  %v566 = vpop.permute.xlu0 %565
  %v568 = vmul.f32 %v561, %v566
  %570 = vrot.lane.b32.xlu0 %v568, 64
  %v571 = vpop.permute.xlu0 %570
  %v573 = vadd.f32 %v139, %v571
  %v574 = vtanh.pop %v573
  %v576 = vrot.slane %v574, 2
  %v578 = vsub.f32 %v475, %v576
  %v580 = vrot.slane %v578, 6
  %581 = vrot.lane.b32.xlu0 %v580, 96
  %v582 = vpop.permute.xlu0 %581
  %v584 = vmul.f32 %v561, %v582
  %586 = vrot.lane.b32.xlu0 %v584, 32
  %v587 = vpop.permute.xlu0 %586
  %v589 = vadd.f32 %v574, %v587
  %v591 = vrot.slane %v589, 6
  %592 = vrot.lane.b32.xlu0 %v591, 64
  %v593 = vpop.permute.xlu0 %592
  %v594 = vsel %vm141, %v593, 0
  %596 = vmatprep.subr.mxu0 0.0
  %597 = vmatpush1.msra.mxu0 %v113
  %598 = vmatprep.subr.mxu0 0.0
  %599 = vmatpush1.msra.mxu0 %v114
  %600 = vmatprep.subr.mxu0 0.0
  %601 = vmatpush1.msra.mxu0 %v115
  %602 = vmatprep.subr.mxu0 0.0
  %603 = vmatpush1.msra.mxu0 %v116
  %604 = vmatprep.subr.mxu0 0.0
  %605 = vmatpush1.msra.mxu0 0.0
  %606 = vmatprep.subr.mxu0 0.0
  %607 = vmatpush1.msra.mxu0 0.0
  %608 = vmatprep.subr.mxu0 0.0
  %609 = vmatpush1.msra.mxu0 0.0
  %610 = vmatprep.subr.mxu0 0.0
  %611 = vmatpush1.msra.mxu0 0.0
  %612 = vmatprep.subr.mxu0 0.0
  %613 = vmatpush1.msra.mxu0 0.0
  %614 = vmatprep.subr.mxu0 0.0
  %615 = vmatpush1.msra.mxu0 0.0
  %616 = vmatprep.subr.mxu0 0.0
  %617 = vmatpush1.msra.mxu0 0.0
  %618 = vmatprep.subr.mxu0 0.0
  %619 = vmatpush1.msra.mxu0 0.0
  %620 = vmatprep.subr.mxu0 0.0
  %621 = vmatpush1.msra.mxu0 0.0
  %622 = vmatprep.subr.mxu0 0.0
  %623 = vmatpush1.msra.mxu0 0.0
  %624 = vmatprep.subr.mxu0 0.0
  %625 = vmatpush1.msra.mxu0 0.0
  %626 = vmatprep.subr.mxu0 0.0
  %627 = vmatpush1.msra.mxu0 0.0
  %628 = vmatprep.subr.mxu0 0.0
  %629 = vmatpush1.msra.mxu0 0.0
  %630 = vmatprep.subr.mxu0 0.0
  %631 = vmatpush1.msra.mxu0 0.0
  %632 = vmatprep.subr.mxu0 0.0
  %633 = vmatpush1.msra.mxu0 0.0
  %634 = vmatprep.subr.mxu0 0.0
  %635 = vmatpush1.msra.mxu0 0.0
  %636 = vmatprep.subr.mxu0 0.0
  %637 = vmatpush1.msra.mxu0 0.0
  %638 = vmatprep.subr.mxu0 0.0
  %639 = vmatpush1.msra.mxu0 0.0
  %640 = vmatprep.subr.mxu0 0.0
  %641 = vmatpush1.msra.mxu0 0.0
  %642 = vmatprep.subr.mxu0 0.0
  %643 = vmatpush1.msra.mxu0 0.0
  %644 = vmatprep.subr.mxu0 0.0
  %645 = vmatpush1.msra.mxu0 0.0
  %646 = vmatprep.subr.mxu0 0.0
  %647 = vmatpush1.msra.mxu0 0.0
  %648 = vmatprep.subr.mxu0 0.0
  %649 = vmatpush1.msra.mxu0 0.0
  %650 = vmatprep.subr.mxu0 0.0
  %651 = vmatpush1.msra.mxu0 0.0
  %652 = vmatprep.subr.mxu0 0.0
  %653 = vmatpush1.msra.mxu0 0.0
  %654 = vmatprep.subr.mxu0 0.0
  %655 = vmatpush1.msra.mxu0 0.0
  %656 = vmatprep.subr.mxu0 0.0
  %657 = vmatpush1.msra.mxu0 0.0
  %658 = vmatprep.subr.mxu0 0.0
  %659 = vmatpush1.msra.mxu0 0.0
  %660 = vmatprep.mubr.f32.mxu0 0.0
  %661 = vmatmul.mubr.f32.gmra.mrb[0].mxu0 %v594
  %v662 = vpop.f32.mrb[0].mxu0
  %v663 = vadd.f32 0.0, %v662
  %v664 = vpop.f32.mrb[0].mxu0
  %665 = vdwg.mxu0
  %v666 = vadd.f32 %v140, %v663
  %v667 = vxor.u32 %v666, 2147483648
  %v668 = vmul.f32 %v667, 1.442695
  %v669 = vpow.pop %v668
  %v670 = vadd.f32 %v669, 1.0
  %v671 = vrcp.pop %v670
  %v672 = vmul.f32 1.0, %v671
  %v673 = vadd.f32 %v663, %v225
  %675 = vrot.lane.b32.xlu0 %v673, 64
  %v676 = vpop.permute.xlu0 %675
  %v678 = vmul.f32 %v672, %v676
  %680 = vrot.lane.b32.xlu0 %v678, 64
  %v681 = vpop.permute.xlu0 %680
  %v683 = vadd.f32 %v140, %v681
  %v684 = vtanh.pop %v683
  %v686 = vrot.slane %v684, 2
  %v688 = vsub.f32 %v589, %v686
  %v690 = vrot.slane %v688, 6
  %691 = vrot.lane.b32.xlu0 %v690, 96
  %v692 = vpop.permute.xlu0 %691
  %v694 = vmul.f32 %v672, %v692
  %696 = vrot.lane.b32.xlu0 %v694, 32
  %v697 = vpop.permute.xlu0 %696
  %v699 = vadd.f32 %v684, %v697
  %701 = vrot.lane.b32.xlu0 %v699, 64
  %v702 = vpop.permute.xlu0 %701
  %v703 = vsel %vm141, %v702, 0
  %705 = vmatprep.subr.mxu0 0.0
  %706 = vmatpush1.msra.mxu0 %v113
  %707 = vmatprep.subr.mxu0 0.0
  %708 = vmatpush1.msra.mxu0 %v114
  %709 = vmatprep.subr.mxu0 0.0
  %710 = vmatpush1.msra.mxu0 %v115
  %711 = vmatprep.subr.mxu0 0.0
  %712 = vmatpush1.msra.mxu0 %v116
  %713 = vmatprep.subr.mxu0 0.0
  %714 = vmatpush1.msra.mxu0 0.0
  %715 = vmatprep.subr.mxu0 0.0
  %716 = vmatpush1.msra.mxu0 0.0
  %717 = vmatprep.subr.mxu0 0.0
  %718 = vmatpush1.msra.mxu0 0.0
  %719 = vmatprep.subr.mxu0 0.0
  %720 = vmatpush1.msra.mxu0 0.0
  %721 = vmatprep.subr.mxu0 0.0
  %722 = vmatpush1.msra.mxu0 0.0
  %723 = vmatprep.subr.mxu0 0.0
  %724 = vmatpush1.msra.mxu0 0.0
  %725 = vmatprep.subr.mxu0 0.0
  %726 = vmatpush1.msra.mxu0 0.0
  %727 = vmatprep.subr.mxu0 0.0
  %728 = vmatpush1.msra.mxu0 0.0
  %729 = vmatprep.subr.mxu0 0.0
  %730 = vmatpush1.msra.mxu0 0.0
  %731 = vmatprep.subr.mxu0 0.0
  %732 = vmatpush1.msra.mxu0 0.0
  %733 = vmatprep.subr.mxu0 0.0
  %734 = vmatpush1.msra.mxu0 0.0
  %735 = vmatprep.subr.mxu0 0.0
  %736 = vmatpush1.msra.mxu0 0.0
  %737 = vmatprep.subr.mxu0 0.0
  %738 = vmatpush1.msra.mxu0 0.0
  %739 = vmatprep.subr.mxu0 0.0
  %740 = vmatpush1.msra.mxu0 0.0
  %741 = vmatprep.subr.mxu0 0.0
  %742 = vmatpush1.msra.mxu0 0.0
  %743 = vmatprep.subr.mxu0 0.0
  %744 = vmatpush1.msra.mxu0 0.0
  %745 = vmatprep.subr.mxu0 0.0
  %746 = vmatpush1.msra.mxu0 0.0
  %747 = vmatprep.subr.mxu0 0.0
  %748 = vmatpush1.msra.mxu0 0.0
  %749 = vmatprep.subr.mxu0 0.0
  %750 = vmatpush1.msra.mxu0 0.0
  %751 = vmatprep.subr.mxu0 0.0
  %752 = vmatpush1.msra.mxu0 0.0
  %753 = vmatprep.subr.mxu0 0.0
  %754 = vmatpush1.msra.mxu0 0.0
  %755 = vmatprep.subr.mxu0 0.0
  %756 = vmatpush1.msra.mxu0 0.0
  %757 = vmatprep.subr.mxu0 0.0
  %758 = vmatpush1.msra.mxu0 0.0
  %759 = vmatprep.subr.mxu0 0.0
  %760 = vmatpush1.msra.mxu0 0.0
  %761 = vmatprep.subr.mxu0 0.0
  %762 = vmatpush1.msra.mxu0 0.0
  %763 = vmatprep.subr.mxu0 0.0
  %764 = vmatpush1.msra.mxu0 0.0
  %765 = vmatprep.subr.mxu0 0.0
  %766 = vmatpush1.msra.mxu0 0.0
  %767 = vmatprep.subr.mxu0 0.0
  %768 = vmatpush1.msra.mxu0 0.0
  %769 = vmatprep.mubr.f32.mxu0 0.0
  %770 = vmatmul.mubr.f32.gmra.mrb[0].mxu0 %v703
  %v771 = vpop.f32.mrb[0].mxu0
  %v772 = vadd.f32 0.0, %v771
  %v773 = vpop.f32.mrb[0].mxu0
  %774 = vdwg.mxu0
  %v776 = vrot.slane %v772, 6
  %v778 = vadd.f32 %v140, %v776
  %v779 = vxor.u32 %v778, 2147483648
  %v780 = vmul.f32 %v779, 1.442695
  %v781 = vpow.pop %v780
  %v782 = vadd.f32 %v781, 1.0
  %v783 = vrcp.pop %v782
  %v784 = vmul.f32 1.0, %v783
  %v785 = vadd.f32 %v772, %v225
  %v787 = vrot.slane %v785, 6
  %788 = vrot.lane.b32.xlu0 %v787, 64
  %v789 = vpop.permute.xlu0 %788
  %v791 = vmul.f32 %v784, %v789
  %793 = vrot.lane.b32.xlu0 %v791, 64
  %v794 = vpop.permute.xlu0 %793
  %v796 = vadd.f32 %v140, %v794
  %v797 = vtanh.pop %v796
  %v799 = vrot.slane %v797, 2
  %v801 = vsub.f32 %v699, %v799
  %v803 = vrot.slane %v801, 6
  %804 = vrot.lane.b32.xlu0 %v803, 96
  %v805 = vpop.permute.xlu0 %804
  %v807 = vmul.f32 %v784, %v805
  %809 = vrot.lane.b32.xlu0 %v807, 32
  %v810 = vpop.permute.xlu0 %809
  %v812 = vadd.f32 %v797, %v810
  %v814 = vrot.slane %v812, 2
  %815 = vrot.lane.b32.xlu0 %v814, 64
  %v816 = vpop.permute.xlu0 %815
  %v817 = vsel %vm141, %v816, 0
  %819 = vmatprep.subr.mxu0 0.0
  %820 = vmatpush1.msra.mxu0 %v113
  %821 = vmatprep.subr.mxu0 0.0
  %822 = vmatpush1.msra.mxu0 %v114
  %823 = vmatprep.subr.mxu0 0.0
  %824 = vmatpush1.msra.mxu0 %v115
  %825 = vmatprep.subr.mxu0 0.0
  %826 = vmatpush1.msra.mxu0 %v116
  %827 = vmatprep.subr.mxu0 0.0
  %828 = vmatpush1.msra.mxu0 0.0
  %829 = vmatprep.subr.mxu0 0.0
  %830 = vmatpush1.msra.mxu0 0.0
  %831 = vmatprep.subr.mxu0 0.0
  %832 = vmatpush1.msra.mxu0 0.0
  %833 = vmatprep.subr.mxu0 0.0
  %834 = vmatpush1.msra.mxu0 0.0
  %835 = vmatprep.subr.mxu0 0.0
  %836 = vmatpush1.msra.mxu0 0.0
  %837 = vmatprep.subr.mxu0 0.0
  %838 = vmatpush1.msra.mxu0 0.0
  %839 = vmatprep.subr.mxu0 0.0
  %840 = vmatpush1.msra.mxu0 0.0
  %841 = vmatprep.subr.mxu0 0.0
  %842 = vmatpush1.msra.mxu0 0.0
  %843 = vmatprep.subr.mxu0 0.0
  %844 = vmatpush1.msra.mxu0 0.0
  %845 = vmatprep.subr.mxu0 0.0
  %846 = vmatpush1.msra.mxu0 0.0
  %847 = vmatprep.subr.mxu0 0.0
  %848 = vmatpush1.msra.mxu0 0.0
  %849 = vmatprep.subr.mxu0 0.0
  %850 = vmatpush1.msra.mxu0 0.0
  %851 = vmatprep.subr.mxu0 0.0
  %852 = vmatpush1.msra.mxu0 0.0
  %853 = vmatprep.subr.mxu0 0.0
  %854 = vmatpush1.msra.mxu0 0.0
  %855 = vmatprep.subr.mxu0 0.0
  %856 = vmatpush1.msra.mxu0 0.0
  %857 = vmatprep.subr.mxu0 0.0
  %858 = vmatpush1.msra.mxu0 0.0
  %859 = vmatprep.subr.mxu0 0.0
  %860 = vmatpush1.msra.mxu0 0.0
  %861 = vmatprep.subr.mxu0 0.0
  %862 = vmatpush1.msra.mxu0 0.0
  %863 = vmatprep.subr.mxu0 0.0
  %864 = vmatpush1.msra.mxu0 0.0
  %865 = vmatprep.subr.mxu0 0.0
  %866 = vmatpush1.msra.mxu0 0.0
  %867 = vmatprep.subr.mxu0 0.0
  %868 = vmatpush1.msra.mxu0 0.0
  %869 = vmatprep.subr.mxu0 0.0
  %870 = vmatpush1.msra.mxu0 0.0
  %871 = vmatprep.subr.mxu0 0.0
  %872 = vmatpush1.msra.mxu0 0.0
  %873 = vmatprep.subr.mxu0 0.0
  %874 = vmatpush1.msra.mxu0 0.0
  %875 = vmatprep.subr.mxu0 0.0
  %876 = vmatpush1.msra.mxu0 0.0
  %877 = vmatprep.subr.mxu0 0.0
  %878 = vmatpush1.msra.mxu0 0.0
  %879 = vmatprep.subr.mxu0 0.0
  %880 = vmatpush1.msra.mxu0 0.0
  %881 = vmatprep.subr.mxu0 0.0
  %882 = vmatpush1.msra.mxu0 0.0
  %883 = vmatprep.mubr.f32.mxu0 0.0
  %884 = vmatmul.mubr.f32.gmra.mrb[0].mxu0 %v817
  %v885 = vpop.f32.mrb[0].mxu0
  %v886 = vadd.f32 0.0, %v885
  %v887 = vpop.f32.mrb[0].mxu0
  %888 = vdwg.mxu0
  %v890 = vrot.slane %v886, 4
  %v892 = vadd.f32 %v140, %v890
  %v893 = vxor.u32 %v892, 2147483648
  %v894 = vmul.f32 %v893, 1.442695
  %v895 = vpow.pop %v894
  %v896 = vadd.f32 %v895, 1.0
  %v897 = vrcp.pop %v896
  %v898 = vmul.f32 1.0, %v897
  %v899 = vadd.f32 %v886, %v225
  %v901 = vrot.slane %v899, 4
  %902 = vrot.lane.b32.xlu0 %v901, 64
  %v903 = vpop.permute.xlu0 %902
  %v905 = vmul.f32 %v898, %v903
  %907 = vrot.lane.b32.xlu0 %v905, 64
  %v908 = vpop.permute.xlu0 %907
  %v910 = vadd.f32 %v140, %v908
  %v911 = vtanh.pop %v910
  %v913 = vrot.slane %v911, 2
  %v915 = vsub.f32 %v812, %v913
  %v917 = vrot.slane %v915, 6
  %918 = vrot.lane.b32.xlu0 %v917, 96
  %v919 = vpop.permute.xlu0 %918
  %v921 = vmul.f32 %v898, %v919
  %923 = vrot.lane.b32.xlu0 %v921, 32
  %v924 = vpop.permute.xlu0 %923
  %v926 = vadd.f32 %v911, %v924
  %v928 = vrot.slane %v926, 4
  %929 = vrot.lane.b32.xlu0 %v928, 64
  %v930 = vpop.permute.xlu0 %929
  %v931 = vsel %vm141, %v930, 0
  %933 = vmatprep.subr.mxu0 0.0
  %934 = vmatpush1.msra.mxu0 %v113
  %935 = vmatprep.subr.mxu0 0.0
  %936 = vmatpush1.msra.mxu0 %v114
  %937 = vmatprep.subr.mxu0 0.0
  %938 = vmatpush1.msra.mxu0 %v115
  %939 = vmatprep.subr.mxu0 0.0
  %940 = vmatpush1.msra.mxu0 %v116
  %941 = vmatprep.subr.mxu0 0.0
  %942 = vmatpush1.msra.mxu0 0.0
  %943 = vmatprep.subr.mxu0 0.0
  %944 = vmatpush1.msra.mxu0 0.0
  %945 = vmatprep.subr.mxu0 0.0
  %946 = vmatpush1.msra.mxu0 0.0
  %947 = vmatprep.subr.mxu0 0.0
  %948 = vmatpush1.msra.mxu0 0.0
  %949 = vmatprep.subr.mxu0 0.0
  %950 = vmatpush1.msra.mxu0 0.0
  %951 = vmatprep.subr.mxu0 0.0
  %952 = vmatpush1.msra.mxu0 0.0
  %953 = vmatprep.subr.mxu0 0.0
  %954 = vmatpush1.msra.mxu0 0.0
  %955 = vmatprep.subr.mxu0 0.0
  %956 = vmatpush1.msra.mxu0 0.0
  %957 = vmatprep.subr.mxu0 0.0
  %958 = vmatpush1.msra.mxu0 0.0
  %959 = vmatprep.subr.mxu0 0.0
  %960 = vmatpush1.msra.mxu0 0.0
  %961 = vmatprep.subr.mxu0 0.0
  %962 = vmatpush1.msra.mxu0 0.0
  %963 = vmatprep.subr.mxu0 0.0
  %964 = vmatpush1.msra.mxu0 0.0
  %965 = vmatprep.subr.mxu0 0.0
  %966 = vmatpush1.msra.mxu0 0.0
  %967 = vmatprep.subr.mxu0 0.0
  %968 = vmatpush1.msra.mxu0 0.0
  %969 = vmatprep.subr.mxu0 0.0
  %970 = vmatpush1.msra.mxu0 0.0
  %971 = vmatprep.subr.mxu0 0.0
  %972 = vmatpush1.msra.mxu0 0.0
  %973 = vmatprep.subr.mxu0 0.0
  %974 = vmatpush1.msra.mxu0 0.0
  %975 = vmatprep.subr.mxu0 0.0
  %976 = vmatpush1.msra.mxu0 0.0
  %977 = vmatprep.subr.mxu0 0.0
  %978 = vmatpush1.msra.mxu0 0.0
  %979 = vmatprep.subr.mxu0 0.0
  %980 = vmatpush1.msra.mxu0 0.0
  %981 = vmatprep.subr.mxu0 0.0
  %982 = vmatpush1.msra.mxu0 0.0
  %983 = vmatprep.subr.mxu0 0.0
  %984 = vmatpush1.msra.mxu0 0.0
  %985 = vmatprep.subr.mxu0 0.0
  %986 = vmatpush1.msra.mxu0 0.0
  %987 = vmatprep.subr.mxu0 0.0
  %988 = vmatpush1.msra.mxu0 0.0
  %989 = vmatprep.subr.mxu0 0.0
  %990 = vmatpush1.msra.mxu0 0.0
  %991 = vmatprep.subr.mxu0 0.0
  %992 = vmatpush1.msra.mxu0 0.0
  %993 = vmatprep.subr.mxu0 0.0
  %994 = vmatpush1.msra.mxu0 0.0
  %995 = vmatprep.subr.mxu0 0.0
  %996 = vmatpush1.msra.mxu0 0.0
  %997 = vmatprep.mubr.f32.mxu0 0.0
  %998 = vmatmul.mubr.f32.gmra.mrb[0].mxu0 %v931
  %v999 = vpop.f32.mrb[0].mxu0
  %v1000 = vadd.f32 0.0, %v999
  %v1001 = vpop.f32.mrb[0].mxu0
  %1002 = vdwg.mxu0
  %v1004 = vrot.slane %v1000, 2
  %v1006 = vadd.f32 %v140, %v1004
  %v1007 = vxor.u32 %v1006, 2147483648
  %v1008 = vmul.f32 %v1007, 1.442695
  %v1009 = vpow.pop %v1008
  %v1010 = vadd.f32 %v1009, 1.0
  %v1011 = vrcp.pop %v1010
  %v1012 = vmul.f32 1.0, %v1011
  %v1013 = vadd.f32 %v1000, %v225
  %v1015 = vrot.slane %v1013, 2
  %1016 = vrot.lane.b32.xlu0 %v1015, 64
  %v1017 = vpop.permute.xlu0 %1016
  %v1019 = vmul.f32 %v1012, %v1017
  %1021 = vrot.lane.b32.xlu0 %v1019, 64
  %v1022 = vpop.permute.xlu0 %1021
  %v1024 = vadd.f32 %v140, %v1022
  %v1025 = vtanh.pop %v1024
  %v1027 = vrot.slane %v1025, 2
  %v1029 = vsub.f32 %v926, %v1027
  %v1031 = vrot.slane %v1029, 6
  %1032 = vrot.lane.b32.xlu0 %v1031, 96
  %v1033 = vpop.permute.xlu0 %1032
  %v1035 = vmul.f32 %v1012, %v1033
  %1037 = vrot.lane.b32.xlu0 %v1035, 32
  %v1038 = vpop.permute.xlu0 %1037
  %v1040 = vadd.f32 %v1025, %v1038
  %vm1041 = vcmask 1041408
  %v1042 = vsel %vm1041, %v248, %v361
  %vm1043 = vcmask 1043456
  %v1044 = vsel %vm1043, %v1042, %v475
  %vm1045 = vcmask 1045504
  %v1046 = vsel %vm1045, %v1044, %v589
  %v1047 = vsel %vm1041, %v699, %v812
  %v1048 = vsel %vm1043, %v1047, %v926
  %v1049 = vsel %vm1045, %v1048, %v1040
  %v1050 = vld [vmem:[%s3 + $0x20] sm:$0xff]
  %v1051 = vld [vmem:[%s3 + $0x28] sm:$0xff]
  %v1052 = vld [vmem:[%s3 + $0x30] sm:$0xff]
  %v1053 = vld [vmem:[%s3 + $0x38] sm:$0xff]
  %v1054 = vld [vmem:[%s3 + $0x40] sm:$0x3]
  %v1055 = vld [vmem:[%s3] sm:$0xff]
  %v1056 = vld [vmem:[%s3 + $0x8] sm:$0xff]
  %v1057 = vld [vmem:[%s3 + $0x10] sm:$0xff]
  %v1058 = vld [vmem:[%s3 + $0x18] sm:$0xff]
  %v1059 = vlaneseq
  %v1060 = vshrl.u32 %v1059, 7
  %v1061 = vsub.s32 0, %v1060
  %v1062 = vrot.slane %v1054, %v1061
  %1065 = vrot.lane.b32.xlu0 %v1046, 64
  %v1066 = vpop.permute.xlu0 %1065
  %1067 = vrot.lane.b32.xlu0 %v1049, 64
  %v1068 = vpop.permute.xlu0 %1067
  %v1069 = vsel %vm141, %v1066, 0
  %v1071 = vsel %vm141, %v1068, 0
  %1073 = vmatprep.subr.mxu0 0.0
  %1074 = vmatpush1.msra.mxu0 %v1055
  %1075 = vmatprep.subr.mxu0 0.0
  %1076 = vmatpush1.msra.mxu0 %v1056
  %1077 = vmatprep.subr.mxu0 0.0
  %1078 = vmatpush1.msra.mxu0 %v1057
  %1079 = vmatprep.subr.mxu0 0.0
  %1080 = vmatpush1.msra.mxu0 %v1058
  %1081 = vmatprep.subr.mxu0 0.0
  %1082 = vmatpush1.msra.mxu0 0.0
  %1083 = vmatprep.subr.mxu0 0.0
  %1084 = vmatpush1.msra.mxu0 0.0
  %1085 = vmatprep.subr.mxu0 0.0
  %1086 = vmatpush1.msra.mxu0 0.0
  %1087 = vmatprep.subr.mxu0 0.0
  %1088 = vmatpush1.msra.mxu0 0.0
  %1089 = vmatprep.subr.mxu0 0.0
  %1090 = vmatpush1.msra.mxu0 0.0
  %1091 = vmatprep.subr.mxu0 0.0
  %1092 = vmatpush1.msra.mxu0 0.0
  %1093 = vmatprep.subr.mxu0 0.0
  %1094 = vmatpush1.msra.mxu0 0.0
  %1095 = vmatprep.subr.mxu0 0.0
  %1096 = vmatpush1.msra.mxu0 0.0
  %1097 = vmatprep.subr.mxu0 0.0
  %1098 = vmatpush1.msra.mxu0 0.0
  %1099 = vmatprep.subr.mxu0 0.0
  %1100 = vmatpush1.msra.mxu0 0.0
  %1101 = vmatprep.subr.mxu0 0.0
  %1102 = vmatpush1.msra.mxu0 0.0
  %1103 = vmatprep.subr.mxu0 0.0
  %1104 = vmatpush1.msra.mxu0 0.0
  %1105 = vmatprep.subr.mxu0 0.0
  %1106 = vmatpush1.msra.mxu0 0.0
  %1107 = vmatprep.subr.mxu0 0.0
  %1108 = vmatpush1.msra.mxu0 0.0
  %1109 = vmatprep.subr.mxu0 0.0
  %1110 = vmatpush1.msra.mxu0 0.0
  %1111 = vmatprep.subr.mxu0 0.0
  %1112 = vmatpush1.msra.mxu0 0.0
  %1113 = vmatprep.subr.mxu0 0.0
  %1114 = vmatpush1.msra.mxu0 0.0
  %1115 = vmatprep.subr.mxu0 0.0
  %1116 = vmatpush1.msra.mxu0 0.0
  %1117 = vmatprep.subr.mxu0 0.0
  %1118 = vmatpush1.msra.mxu0 0.0
  %1119 = vmatprep.subr.mxu0 0.0
  %1120 = vmatpush1.msra.mxu0 0.0
  %1121 = vmatprep.subr.mxu0 0.0
  %1122 = vmatpush1.msra.mxu0 0.0
  %1123 = vmatprep.subr.mxu0 0.0
  %1124 = vmatpush1.msra.mxu0 0.0
  %1125 = vmatprep.subr.mxu0 0.0
  %1126 = vmatpush1.msra.mxu0 0.0
  %1127 = vmatprep.subr.mxu0 0.0
  %1128 = vmatpush1.msra.mxu0 0.0
  %1129 = vmatprep.subr.mxu0 0.0
  %1130 = vmatpush1.msra.mxu0 0.0
  %1131 = vmatprep.subr.mxu0 0.0
  %1132 = vmatpush1.msra.mxu0 0.0
  %1133 = vmatprep.subr.mxu0 0.0
  %1134 = vmatpush1.msra.mxu0 0.0
  %1135 = vmatprep.subr.mxu0 0.0
  %1136 = vmatpush1.msra.mxu0 0.0
  %1137 = vmatprep.mubr.f32.mxu0 0.0
  %1138 = vmatmul.mubr.f32.gmra.mrb[0].mxu0 %v1069
  %v1139 = vpop.f32.mrb[0].mxu0
  %v1140 = vadd.f32 %v1062, %v1139
  %v1141 = vpop.f32.mrb[0].mxu0
  %1142 = vmatprep.mubr.f32.mxu0 0.0
  %1143 = vmatmul.mubr.f32.gmra.mrb[0].mxu0 %v1071
  %v1144 = vpop.f32.mrb[0].mxu0
  %v1145 = vadd.f32 %v1062, %v1144
  %v1146 = vpop.f32.mrb[0].mxu0
  %1147 = vdwg.mxu0
  %1148 = vmatprep.subr.mxu0 0.0
  %1149 = vmatpush1.msra.mxu0 %v1050
  %1150 = vmatprep.subr.mxu0 0.0
  %1151 = vmatpush1.msra.mxu0 %v1051
  %1152 = vmatprep.subr.mxu0 0.0
  %1153 = vmatpush1.msra.mxu0 %v1052
  %1154 = vmatprep.subr.mxu0 0.0
  %1155 = vmatpush1.msra.mxu0 %v1053
  %1156 = vmatprep.subr.mxu0 0.0
  %1157 = vmatpush1.msra.mxu0 0.0
  %1158 = vmatprep.subr.mxu0 0.0
  %1159 = vmatpush1.msra.mxu0 0.0
  %1160 = vmatprep.subr.mxu0 0.0
  %1161 = vmatpush1.msra.mxu0 0.0
  %1162 = vmatprep.subr.mxu0 0.0
  %1163 = vmatpush1.msra.mxu0 0.0
  %1164 = vmatprep.subr.mxu0 0.0
  %1165 = vmatpush1.msra.mxu0 0.0
  %1166 = vmatprep.subr.mxu0 0.0
  %1167 = vmatpush1.msra.mxu0 0.0
  %1168 = vmatprep.subr.mxu0 0.0
  %1169 = vmatpush1.msra.mxu0 0.0
  %1170 = vmatprep.subr.mxu0 0.0
  %1171 = vmatpush1.msra.mxu0 0.0
  %1172 = vmatprep.subr.mxu0 0.0
  %1173 = vmatpush1.msra.mxu0 0.0
  %1174 = vmatprep.subr.mxu0 0.0
  %1175 = vmatpush1.msra.mxu0 0.0
  %1176 = vmatprep.subr.mxu0 0.0
  %1177 = vmatpush1.msra.mxu0 0.0
  %1178 = vmatprep.subr.mxu0 0.0
  %1179 = vmatpush1.msra.mxu0 0.0
  %1180 = vmatprep.subr.mxu0 0.0
  %1181 = vmatpush1.msra.mxu0 0.0
  %1182 = vmatprep.subr.mxu0 0.0
  %1183 = vmatpush1.msra.mxu0 0.0
  %1184 = vmatprep.subr.mxu0 0.0
  %1185 = vmatpush1.msra.mxu0 0.0
  %1186 = vmatprep.subr.mxu0 0.0
  %1187 = vmatpush1.msra.mxu0 0.0
  %1188 = vmatprep.subr.mxu0 0.0
  %1189 = vmatpush1.msra.mxu0 0.0
  %1190 = vmatprep.subr.mxu0 0.0
  %1191 = vmatpush1.msra.mxu0 0.0
  %1192 = vmatprep.subr.mxu0 0.0
  %1193 = vmatpush1.msra.mxu0 0.0
  %1194 = vmatprep.subr.mxu0 0.0
  %1195 = vmatpush1.msra.mxu0 0.0
  %1196 = vmatprep.subr.mxu0 0.0
  %1197 = vmatpush1.msra.mxu0 0.0
  %1198 = vmatprep.subr.mxu0 0.0
  %1199 = vmatpush1.msra.mxu0 0.0
  %1200 = vmatprep.subr.mxu0 0.0
  %1201 = vmatpush1.msra.mxu0 0.0
  %1202 = vmatprep.subr.mxu0 0.0
  %1203 = vmatpush1.msra.mxu0 0.0
  %1204 = vmatprep.subr.mxu0 0.0
  %1205 = vmatpush1.msra.mxu0 0.0
  %1206 = vmatprep.subr.mxu0 0.0
  %1207 = vmatpush1.msra.mxu0 0.0
  %1208 = vmatprep.subr.mxu0 0.0
  %1209 = vmatpush1.msra.mxu0 0.0
  %1210 = vmatprep.subr.mxu0 0.0
  %1211 = vmatpush1.msra.mxu0 0.0
  %1212 = vmatprep.mubr.f32.mxu0 0.0
  %1213 = vmatmul.mubr.f32.gmra.mrb[0].mxu0 %v143
  %v1214 = vpop.f32.mrb[0].mxu0
  %v1215 = vadd.f32 0.0, %v1214
  %v1216 = vpop.f32.mrb[0].mxu0
  %1217 = vdwg.mxu0
  %v1218 = vadd.f32 %v1140, %v1215
  %v1219 = vxor.u32 %v1218, 2147483648
  %v1220 = vmul.f32 %v1219, 1.442695
  %v1221 = vpow.pop %v1220
  %v1222 = vadd.f32 %v1221, 1.0
  %v1223 = vrcp.pop %v1222
  %v1224 = vmul.f32 1.0, %v1223
  %v1225 = vlaneseq
  %v1226 = vshrl.u32 %v1225, 7
  %v1227 = vsub.s32 1, %v1226
  %v1228 = vrot.slane %v1054, %v1227
  %v1229 = vadd.f32 %v1215, %v1228
  %1231 = vrot.lane.b32.xlu0 %v1229, 64
  %v1232 = vpop.permute.xlu0 %1231
  %v1234 = vmul.f32 %v1224, %v1232
  %1236 = vrot.lane.b32.xlu0 %v1234, 64
  %v1237 = vpop.permute.xlu0 %1236
  %v1239 = vadd.f32 %v1140, %v1237
  %v1240 = vtanh.pop %v1239
  %v1241 = vsub.f32 0.0, %v1240
  %1243 = vrot.lane.b32.xlu0 %v1241, 96
  %v1244 = vpop.permute.xlu0 %1243
  %v1246 = vmul.f32 %v1224, %v1244
  %1248 = vrot.lane.b32.xlu0 %v1246, 32
  %v1249 = vpop.permute.xlu0 %1248
  %v1251 = vadd.f32 %v1240, %v1249
  %1253 = vrot.lane.b32.xlu0 %v1251, 64
  %v1254 = vpop.permute.xlu0 %1253
  %v1255 = vsel %vm141, %v1254, 0
  %1257 = vmatprep.subr.mxu0 0.0
  %1258 = vmatpush1.msra.mxu0 %v1050
  %1259 = vmatprep.subr.mxu0 0.0
  %1260 = vmatpush1.msra.mxu0 %v1051
  %1261 = vmatprep.subr.mxu0 0.0
  %1262 = vmatpush1.msra.mxu0 %v1052
  %1263 = vmatprep.subr.mxu0 0.0
  %1264 = vmatpush1.msra.mxu0 %v1053
  %1265 = vmatprep.subr.mxu0 0.0
  %1266 = vmatpush1.msra.mxu0 0.0
  %1267 = vmatprep.subr.mxu0 0.0
  %1268 = vmatpush1.msra.mxu0 0.0
  %1269 = vmatprep.subr.mxu0 0.0
  %1270 = vmatpush1.msra.mxu0 0.0
  %1271 = vmatprep.subr.mxu0 0.0
  %1272 = vmatpush1.msra.mxu0 0.0
  %1273 = vmatprep.subr.mxu0 0.0
  %1274 = vmatpush1.msra.mxu0 0.0
  %1275 = vmatprep.subr.mxu0 0.0
  %1276 = vmatpush1.msra.mxu0 0.0
  %1277 = vmatprep.subr.mxu0 0.0
  %1278 = vmatpush1.msra.mxu0 0.0
  %1279 = vmatprep.subr.mxu0 0.0
  %1280 = vmatpush1.msra.mxu0 0.0
  %1281 = vmatprep.subr.mxu0 0.0
  %1282 = vmatpush1.msra.mxu0 0.0
  %1283 = vmatprep.subr.mxu0 0.0
  %1284 = vmatpush1.msra.mxu0 0.0
  %1285 = vmatprep.subr.mxu0 0.0
  %1286 = vmatpush1.msra.mxu0 0.0
  %1287 = vmatprep.subr.mxu0 0.0
  %1288 = vmatpush1.msra.mxu0 0.0
  %1289 = vmatprep.subr.mxu0 0.0
  %1290 = vmatpush1.msra.mxu0 0.0
  %1291 = vmatprep.subr.mxu0 0.0
  %1292 = vmatpush1.msra.mxu0 0.0
  %1293 = vmatprep.subr.mxu0 0.0
  %1294 = vmatpush1.msra.mxu0 0.0
  %1295 = vmatprep.subr.mxu0 0.0
  %1296 = vmatpush1.msra.mxu0 0.0
  %1297 = vmatprep.subr.mxu0 0.0
  %1298 = vmatpush1.msra.mxu0 0.0
  %1299 = vmatprep.subr.mxu0 0.0
  %1300 = vmatpush1.msra.mxu0 0.0
  %1301 = vmatprep.subr.mxu0 0.0
  %1302 = vmatpush1.msra.mxu0 0.0
  %1303 = vmatprep.subr.mxu0 0.0
  %1304 = vmatpush1.msra.mxu0 0.0
  %1305 = vmatprep.subr.mxu0 0.0
  %1306 = vmatpush1.msra.mxu0 0.0
  %1307 = vmatprep.subr.mxu0 0.0
  %1308 = vmatpush1.msra.mxu0 0.0
  %1309 = vmatprep.subr.mxu0 0.0
  %1310 = vmatpush1.msra.mxu0 0.0
  %1311 = vmatprep.subr.mxu0 0.0
  %1312 = vmatpush1.msra.mxu0 0.0
  %1313 = vmatprep.subr.mxu0 0.0
  %1314 = vmatpush1.msra.mxu0 0.0
  %1315 = vmatprep.subr.mxu0 0.0
  %1316 = vmatpush1.msra.mxu0 0.0
  %1317 = vmatprep.subr.mxu0 0.0
  %1318 = vmatpush1.msra.mxu0 0.0
  %1319 = vmatprep.subr.mxu0 0.0
  %1320 = vmatpush1.msra.mxu0 0.0
  %1321 = vmatprep.mubr.f32.mxu0 0.0
  %1322 = vmatmul.mubr.f32.gmra.mrb[0].mxu0 %v1255
  %v1323 = vpop.f32.mrb[0].mxu0
  %v1324 = vadd.f32 0.0, %v1323
  %v1325 = vpop.f32.mrb[0].mxu0
  %1326 = vdwg.mxu0
  %v1328 = vrot.slane %v1324, 6
  %v1330 = vadd.f32 %v1140, %v1328
  %v1331 = vxor.u32 %v1330, 2147483648
  %v1332 = vmul.f32 %v1331, 1.442695
  %v1333 = vpow.pop %v1332
  %v1334 = vadd.f32 %v1333, 1.0
  %v1335 = vrcp.pop %v1334
  %v1336 = vmul.f32 1.0, %v1335
  %v1337 = vadd.f32 %v1324, %v1228
  %v1339 = vrot.slane %v1337, 6
  %1340 = vrot.lane.b32.xlu0 %v1339, 64
  %v1341 = vpop.permute.xlu0 %1340
  %v1343 = vmul.f32 %v1336, %v1341
  %1345 = vrot.lane.b32.xlu0 %v1343, 64
  %v1346 = vpop.permute.xlu0 %1345
  %v1348 = vadd.f32 %v1140, %v1346
  %v1349 = vtanh.pop %v1348
  %v1351 = vrot.slane %v1349, 2
  %v1353 = vsub.f32 %v1251, %v1351
  %v1355 = vrot.slane %v1353, 6
  %1356 = vrot.lane.b32.xlu0 %v1355, 96
  %v1357 = vpop.permute.xlu0 %1356
  %v1359 = vmul.f32 %v1336, %v1357
  %1361 = vrot.lane.b32.xlu0 %v1359, 32
  %v1362 = vpop.permute.xlu0 %1361
  %v1364 = vadd.f32 %v1349, %v1362
  %v1366 = vrot.slane %v1364, 2
  %1367 = vrot.lane.b32.xlu0 %v1366, 64
  %v1368 = vpop.permute.xlu0 %1367
  %v1369 = vsel %vm141, %v1368, 0
  %1371 = vmatprep.subr.mxu0 0.0
  %1372 = vmatpush1.msra.mxu0 %v1050
  %1373 = vmatprep.subr.mxu0 0.0
  %1374 = vmatpush1.msra.mxu0 %v1051
  %1375 = vmatprep.subr.mxu0 0.0
  %1376 = vmatpush1.msra.mxu0 %v1052
  %1377 = vmatprep.subr.mxu0 0.0
  %1378 = vmatpush1.msra.mxu0 %v1053
  %1379 = vmatprep.subr.mxu0 0.0
  %1380 = vmatpush1.msra.mxu0 0.0
  %1381 = vmatprep.subr.mxu0 0.0
  %1382 = vmatpush1.msra.mxu0 0.0
  %1383 = vmatprep.subr.mxu0 0.0
  %1384 = vmatpush1.msra.mxu0 0.0
  %1385 = vmatprep.subr.mxu0 0.0
  %1386 = vmatpush1.msra.mxu0 0.0
  %1387 = vmatprep.subr.mxu0 0.0
  %1388 = vmatpush1.msra.mxu0 0.0
  %1389 = vmatprep.subr.mxu0 0.0
  %1390 = vmatpush1.msra.mxu0 0.0
  %1391 = vmatprep.subr.mxu0 0.0
  %1392 = vmatpush1.msra.mxu0 0.0
  %1393 = vmatprep.subr.mxu0 0.0
  %1394 = vmatpush1.msra.mxu0 0.0
  %1395 = vmatprep.subr.mxu0 0.0
  %1396 = vmatpush1.msra.mxu0 0.0
  %1397 = vmatprep.subr.mxu0 0.0
  %1398 = vmatpush1.msra.mxu0 0.0
  %1399 = vmatprep.subr.mxu0 0.0
  %1400 = vmatpush1.msra.mxu0 0.0
  %1401 = vmatprep.subr.mxu0 0.0
  %1402 = vmatpush1.msra.mxu0 0.0
  %1403 = vmatprep.subr.mxu0 0.0
  %1404 = vmatpush1.msra.mxu0 0.0
  %1405 = vmatprep.subr.mxu0 0.0
  %1406 = vmatpush1.msra.mxu0 0.0
  %1407 = vmatprep.subr.mxu0 0.0
  %1408 = vmatpush1.msra.mxu0 0.0
  %1409 = vmatprep.subr.mxu0 0.0
  %1410 = vmatpush1.msra.mxu0 0.0
  %1411 = vmatprep.subr.mxu0 0.0
  %1412 = vmatpush1.msra.mxu0 0.0
  %1413 = vmatprep.subr.mxu0 0.0
  %1414 = vmatpush1.msra.mxu0 0.0
  %1415 = vmatprep.subr.mxu0 0.0
  %1416 = vmatpush1.msra.mxu0 0.0
  %1417 = vmatprep.subr.mxu0 0.0
  %1418 = vmatpush1.msra.mxu0 0.0
  %1419 = vmatprep.subr.mxu0 0.0
  %1420 = vmatpush1.msra.mxu0 0.0
  %1421 = vmatprep.subr.mxu0 0.0
  %1422 = vmatpush1.msra.mxu0 0.0
  %1423 = vmatprep.subr.mxu0 0.0
  %1424 = vmatpush1.msra.mxu0 0.0
  %1425 = vmatprep.subr.mxu0 0.0
  %1426 = vmatpush1.msra.mxu0 0.0
  %1427 = vmatprep.subr.mxu0 0.0
  %1428 = vmatpush1.msra.mxu0 0.0
  %1429 = vmatprep.subr.mxu0 0.0
  %1430 = vmatpush1.msra.mxu0 0.0
  %1431 = vmatprep.subr.mxu0 0.0
  %1432 = vmatpush1.msra.mxu0 0.0
  %1433 = vmatprep.subr.mxu0 0.0
  %1434 = vmatpush1.msra.mxu0 0.0
  %1435 = vmatprep.mubr.f32.mxu0 0.0
  %1436 = vmatmul.mubr.f32.gmra.mrb[0].mxu0 %v1369
  %v1437 = vpop.f32.mrb[0].mxu0
  %v1438 = vadd.f32 0.0, %v1437
  %v1439 = vpop.f32.mrb[0].mxu0
  %1440 = vdwg.mxu0
  %v1442 = vrot.slane %v1438, 4
  %v1444 = vadd.f32 %v1140, %v1442
  %v1445 = vxor.u32 %v1444, 2147483648
  %v1446 = vmul.f32 %v1445, 1.442695
  %v1447 = vpow.pop %v1446
  %v1448 = vadd.f32 %v1447, 1.0
  %v1449 = vrcp.pop %v1448
  %v1450 = vmul.f32 1.0, %v1449
  %v1451 = vadd.f32 %v1438, %v1228
  %v1453 = vrot.slane %v1451, 4
  %1454 = vrot.lane.b32.xlu0 %v1453, 64
  %v1455 = vpop.permute.xlu0 %1454
  %v1457 = vmul.f32 %v1450, %v1455
  %1459 = vrot.lane.b32.xlu0 %v1457, 64
  %v1460 = vpop.permute.xlu0 %1459
  %v1462 = vadd.f32 %v1140, %v1460
  %v1463 = vtanh.pop %v1462
  %v1465 = vrot.slane %v1463, 2
  %v1467 = vsub.f32 %v1364, %v1465
  %v1469 = vrot.slane %v1467, 6
  %1470 = vrot.lane.b32.xlu0 %v1469, 96
  %v1471 = vpop.permute.xlu0 %1470
  %v1473 = vmul.f32 %v1450, %v1471
  %1475 = vrot.lane.b32.xlu0 %v1473, 32
  %v1476 = vpop.permute.xlu0 %1475
  %v1478 = vadd.f32 %v1463, %v1476
  %v1480 = vrot.slane %v1478, 4
  %1481 = vrot.lane.b32.xlu0 %v1480, 64
  %v1482 = vpop.permute.xlu0 %1481
  %v1483 = vsel %vm141, %v1482, 0
  %1485 = vmatprep.subr.mxu0 0.0
  %1486 = vmatpush1.msra.mxu0 %v1050
  %1487 = vmatprep.subr.mxu0 0.0
  %1488 = vmatpush1.msra.mxu0 %v1051
  %1489 = vmatprep.subr.mxu0 0.0
  %1490 = vmatpush1.msra.mxu0 %v1052
  %1491 = vmatprep.subr.mxu0 0.0
  %1492 = vmatpush1.msra.mxu0 %v1053
  %1493 = vmatprep.subr.mxu0 0.0
  %1494 = vmatpush1.msra.mxu0 0.0
  %1495 = vmatprep.subr.mxu0 0.0
  %1496 = vmatpush1.msra.mxu0 0.0
  %1497 = vmatprep.subr.mxu0 0.0
  %1498 = vmatpush1.msra.mxu0 0.0
  %1499 = vmatprep.subr.mxu0 0.0
  %1500 = vmatpush1.msra.mxu0 0.0
  %1501 = vmatprep.subr.mxu0 0.0
  %1502 = vmatpush1.msra.mxu0 0.0
  %1503 = vmatprep.subr.mxu0 0.0
  %1504 = vmatpush1.msra.mxu0 0.0
  %1505 = vmatprep.subr.mxu0 0.0
  %1506 = vmatpush1.msra.mxu0 0.0
  %1507 = vmatprep.subr.mxu0 0.0
  %1508 = vmatpush1.msra.mxu0 0.0
  %1509 = vmatprep.subr.mxu0 0.0
  %1510 = vmatpush1.msra.mxu0 0.0
  %1511 = vmatprep.subr.mxu0 0.0
  %1512 = vmatpush1.msra.mxu0 0.0
  %1513 = vmatprep.subr.mxu0 0.0
  %1514 = vmatpush1.msra.mxu0 0.0
  %1515 = vmatprep.subr.mxu0 0.0
  %1516 = vmatpush1.msra.mxu0 0.0
  %1517 = vmatprep.subr.mxu0 0.0
  %1518 = vmatpush1.msra.mxu0 0.0
  %1519 = vmatprep.subr.mxu0 0.0
  %1520 = vmatpush1.msra.mxu0 0.0
  %1521 = vmatprep.subr.mxu0 0.0
  %1522 = vmatpush1.msra.mxu0 0.0
  %1523 = vmatprep.subr.mxu0 0.0
  %1524 = vmatpush1.msra.mxu0 0.0
  %1525 = vmatprep.subr.mxu0 0.0
  %1526 = vmatpush1.msra.mxu0 0.0
  %1527 = vmatprep.subr.mxu0 0.0
  %1528 = vmatpush1.msra.mxu0 0.0
  %1529 = vmatprep.subr.mxu0 0.0
  %1530 = vmatpush1.msra.mxu0 0.0
  %1531 = vmatprep.subr.mxu0 0.0
  %1532 = vmatpush1.msra.mxu0 0.0
  %1533 = vmatprep.subr.mxu0 0.0
  %1534 = vmatpush1.msra.mxu0 0.0
  %1535 = vmatprep.subr.mxu0 0.0
  %1536 = vmatpush1.msra.mxu0 0.0
  %1537 = vmatprep.subr.mxu0 0.0
  %1538 = vmatpush1.msra.mxu0 0.0
  %1539 = vmatprep.subr.mxu0 0.0
  %1540 = vmatpush1.msra.mxu0 0.0
  %1541 = vmatprep.subr.mxu0 0.0
  %1542 = vmatpush1.msra.mxu0 0.0
  %1543 = vmatprep.subr.mxu0 0.0
  %1544 = vmatpush1.msra.mxu0 0.0
  %1545 = vmatprep.subr.mxu0 0.0
  %1546 = vmatpush1.msra.mxu0 0.0
  %1547 = vmatprep.subr.mxu0 0.0
  %1548 = vmatpush1.msra.mxu0 0.0
  %1549 = vmatprep.mubr.f32.mxu0 0.0
  %1550 = vmatmul.mubr.f32.gmra.mrb[0].mxu0 %v1483
  %v1551 = vpop.f32.mrb[0].mxu0
  %v1552 = vadd.f32 0.0, %v1551
  %v1553 = vpop.f32.mrb[0].mxu0
  %1554 = vdwg.mxu0
  %v1556 = vrot.slane %v1552, 2
  %v1558 = vadd.f32 %v1140, %v1556
  %v1559 = vxor.u32 %v1558, 2147483648
  %v1560 = vmul.f32 %v1559, 1.442695
  %v1561 = vpow.pop %v1560
  %v1562 = vadd.f32 %v1561, 1.0
  %v1563 = vrcp.pop %v1562
  %v1564 = vmul.f32 1.0, %v1563
  %v1565 = vadd.f32 %v1552, %v1228
  %v1567 = vrot.slane %v1565, 2
  %1568 = vrot.lane.b32.xlu0 %v1567, 64
  %v1569 = vpop.permute.xlu0 %1568
  %v1571 = vmul.f32 %v1564, %v1569
  %1573 = vrot.lane.b32.xlu0 %v1571, 64
  %v1574 = vpop.permute.xlu0 %1573
  %v1576 = vadd.f32 %v1140, %v1574
  %v1577 = vtanh.pop %v1576
  %v1579 = vrot.slane %v1577, 2
  %v1581 = vsub.f32 %v1478, %v1579
  %v1583 = vrot.slane %v1581, 6
  %1584 = vrot.lane.b32.xlu0 %v1583, 96
  %v1585 = vpop.permute.xlu0 %1584
  %v1587 = vmul.f32 %v1564, %v1585
  %1589 = vrot.lane.b32.xlu0 %v1587, 32
  %v1590 = vpop.permute.xlu0 %1589
  %v1592 = vadd.f32 %v1577, %v1590
  %v1594 = vrot.slane %v1592, 6
  %1595 = vrot.lane.b32.xlu0 %v1594, 64
  %v1596 = vpop.permute.xlu0 %1595
  %v1597 = vsel %vm141, %v1596, 0
  %1599 = vmatprep.subr.mxu0 0.0
  %1600 = vmatpush1.msra.mxu0 %v1050
  %1601 = vmatprep.subr.mxu0 0.0
  %1602 = vmatpush1.msra.mxu0 %v1051
  %1603 = vmatprep.subr.mxu0 0.0
  %1604 = vmatpush1.msra.mxu0 %v1052
  %1605 = vmatprep.subr.mxu0 0.0
  %1606 = vmatpush1.msra.mxu0 %v1053
  %1607 = vmatprep.subr.mxu0 0.0
  %1608 = vmatpush1.msra.mxu0 0.0
  %1609 = vmatprep.subr.mxu0 0.0
  %1610 = vmatpush1.msra.mxu0 0.0
  %1611 = vmatprep.subr.mxu0 0.0
  %1612 = vmatpush1.msra.mxu0 0.0
  %1613 = vmatprep.subr.mxu0 0.0
  %1614 = vmatpush1.msra.mxu0 0.0
  %1615 = vmatprep.subr.mxu0 0.0
  %1616 = vmatpush1.msra.mxu0 0.0
  %1617 = vmatprep.subr.mxu0 0.0
  %1618 = vmatpush1.msra.mxu0 0.0
  %1619 = vmatprep.subr.mxu0 0.0
  %1620 = vmatpush1.msra.mxu0 0.0
  %1621 = vmatprep.subr.mxu0 0.0
  %1622 = vmatpush1.msra.mxu0 0.0
  %1623 = vmatprep.subr.mxu0 0.0
  %1624 = vmatpush1.msra.mxu0 0.0
  %1625 = vmatprep.subr.mxu0 0.0
  %1626 = vmatpush1.msra.mxu0 0.0
  %1627 = vmatprep.subr.mxu0 0.0
  %1628 = vmatpush1.msra.mxu0 0.0
  %1629 = vmatprep.subr.mxu0 0.0
  %1630 = vmatpush1.msra.mxu0 0.0
  %1631 = vmatprep.subr.mxu0 0.0
  %1632 = vmatpush1.msra.mxu0 0.0
  %1633 = vmatprep.subr.mxu0 0.0
  %1634 = vmatpush1.msra.mxu0 0.0
  %1635 = vmatprep.subr.mxu0 0.0
  %1636 = vmatpush1.msra.mxu0 0.0
  %1637 = vmatprep.subr.mxu0 0.0
  %1638 = vmatpush1.msra.mxu0 0.0
  %1639 = vmatprep.subr.mxu0 0.0
  %1640 = vmatpush1.msra.mxu0 0.0
  %1641 = vmatprep.subr.mxu0 0.0
  %1642 = vmatpush1.msra.mxu0 0.0
  %1643 = vmatprep.subr.mxu0 0.0
  %1644 = vmatpush1.msra.mxu0 0.0
  %1645 = vmatprep.subr.mxu0 0.0
  %1646 = vmatpush1.msra.mxu0 0.0
  %1647 = vmatprep.subr.mxu0 0.0
  %1648 = vmatpush1.msra.mxu0 0.0
  %1649 = vmatprep.subr.mxu0 0.0
  %1650 = vmatpush1.msra.mxu0 0.0
  %1651 = vmatprep.subr.mxu0 0.0
  %1652 = vmatpush1.msra.mxu0 0.0
  %1653 = vmatprep.subr.mxu0 0.0
  %1654 = vmatpush1.msra.mxu0 0.0
  %1655 = vmatprep.subr.mxu0 0.0
  %1656 = vmatpush1.msra.mxu0 0.0
  %1657 = vmatprep.subr.mxu0 0.0
  %1658 = vmatpush1.msra.mxu0 0.0
  %1659 = vmatprep.subr.mxu0 0.0
  %1660 = vmatpush1.msra.mxu0 0.0
  %1661 = vmatprep.subr.mxu0 0.0
  %1662 = vmatpush1.msra.mxu0 0.0
  %1663 = vmatprep.mubr.f32.mxu0 0.0
  %1664 = vmatmul.mubr.f32.gmra.mrb[0].mxu0 %v1597
  %v1665 = vpop.f32.mrb[0].mxu0
  %v1666 = vadd.f32 0.0, %v1665
  %v1667 = vpop.f32.mrb[0].mxu0
  %1668 = vdwg.mxu0
  %v1669 = vadd.f32 %v1145, %v1666
  %v1670 = vxor.u32 %v1669, 2147483648
  %v1671 = vmul.f32 %v1670, 1.442695
  %v1672 = vpow.pop %v1671
  %v1673 = vadd.f32 %v1672, 1.0
  %v1674 = vrcp.pop %v1673
  %v1675 = vmul.f32 1.0, %v1674
  %v1676 = vadd.f32 %v1666, %v1228
  %1678 = vrot.lane.b32.xlu0 %v1676, 64
  %v1679 = vpop.permute.xlu0 %1678
  %v1681 = vmul.f32 %v1675, %v1679
  %1683 = vrot.lane.b32.xlu0 %v1681, 64
  %v1684 = vpop.permute.xlu0 %1683
  %v1686 = vadd.f32 %v1145, %v1684
  %v1687 = vtanh.pop %v1686
  %v1689 = vrot.slane %v1687, 2
  %v1691 = vsub.f32 %v1592, %v1689
  %v1693 = vrot.slane %v1691, 6
  %1694 = vrot.lane.b32.xlu0 %v1693, 96
  %v1695 = vpop.permute.xlu0 %1694
  %v1697 = vmul.f32 %v1675, %v1695
  %1699 = vrot.lane.b32.xlu0 %v1697, 32
  %v1700 = vpop.permute.xlu0 %1699
  %v1702 = vadd.f32 %v1687, %v1700
  %1704 = vrot.lane.b32.xlu0 %v1702, 64
  %v1705 = vpop.permute.xlu0 %1704
  %v1706 = vsel %vm141, %v1705, 0
  %1708 = vmatprep.subr.mxu0 0.0
  %1709 = vmatpush1.msra.mxu0 %v1050
  %1710 = vmatprep.subr.mxu0 0.0
  %1711 = vmatpush1.msra.mxu0 %v1051
  %1712 = vmatprep.subr.mxu0 0.0
  %1713 = vmatpush1.msra.mxu0 %v1052
  %1714 = vmatprep.subr.mxu0 0.0
  %1715 = vmatpush1.msra.mxu0 %v1053
  %1716 = vmatprep.subr.mxu0 0.0
  %1717 = vmatpush1.msra.mxu0 0.0
  %1718 = vmatprep.subr.mxu0 0.0
  %1719 = vmatpush1.msra.mxu0 0.0
  %1720 = vmatprep.subr.mxu0 0.0
  %1721 = vmatpush1.msra.mxu0 0.0
  %1722 = vmatprep.subr.mxu0 0.0
  %1723 = vmatpush1.msra.mxu0 0.0
  %1724 = vmatprep.subr.mxu0 0.0
  %1725 = vmatpush1.msra.mxu0 0.0
  %1726 = vmatprep.subr.mxu0 0.0
  %1727 = vmatpush1.msra.mxu0 0.0
  %1728 = vmatprep.subr.mxu0 0.0
  %1729 = vmatpush1.msra.mxu0 0.0
  %1730 = vmatprep.subr.mxu0 0.0
  %1731 = vmatpush1.msra.mxu0 0.0
  %1732 = vmatprep.subr.mxu0 0.0
  %1733 = vmatpush1.msra.mxu0 0.0
  %1734 = vmatprep.subr.mxu0 0.0
  %1735 = vmatpush1.msra.mxu0 0.0
  %1736 = vmatprep.subr.mxu0 0.0
  %1737 = vmatpush1.msra.mxu0 0.0
  %1738 = vmatprep.subr.mxu0 0.0
  %1739 = vmatpush1.msra.mxu0 0.0
  %1740 = vmatprep.subr.mxu0 0.0
  %1741 = vmatpush1.msra.mxu0 0.0
  %1742 = vmatprep.subr.mxu0 0.0
  %1743 = vmatpush1.msra.mxu0 0.0
  %1744 = vmatprep.subr.mxu0 0.0
  %1745 = vmatpush1.msra.mxu0 0.0
  %1746 = vmatprep.subr.mxu0 0.0
  %1747 = vmatpush1.msra.mxu0 0.0
  %1748 = vmatprep.subr.mxu0 0.0
  %1749 = vmatpush1.msra.mxu0 0.0
  %1750 = vmatprep.subr.mxu0 0.0
  %1751 = vmatpush1.msra.mxu0 0.0
  %1752 = vmatprep.subr.mxu0 0.0
  %1753 = vmatpush1.msra.mxu0 0.0
  %1754 = vmatprep.subr.mxu0 0.0
  %1755 = vmatpush1.msra.mxu0 0.0
  %1756 = vmatprep.subr.mxu0 0.0
  %1757 = vmatpush1.msra.mxu0 0.0
  %1758 = vmatprep.subr.mxu0 0.0
  %1759 = vmatpush1.msra.mxu0 0.0
  %1760 = vmatprep.subr.mxu0 0.0
  %1761 = vmatpush1.msra.mxu0 0.0
  %1762 = vmatprep.subr.mxu0 0.0
  %1763 = vmatpush1.msra.mxu0 0.0
  %1764 = vmatprep.subr.mxu0 0.0
  %1765 = vmatpush1.msra.mxu0 0.0
  %1766 = vmatprep.subr.mxu0 0.0
  %1767 = vmatpush1.msra.mxu0 0.0
  %1768 = vmatprep.subr.mxu0 0.0
  %1769 = vmatpush1.msra.mxu0 0.0
  %1770 = vmatprep.subr.mxu0 0.0
  %1771 = vmatpush1.msra.mxu0 0.0
  %1772 = vmatprep.mubr.f32.mxu0 0.0
  %1773 = vmatmul.mubr.f32.gmra.mrb[0].mxu0 %v1706
  %v1774 = vpop.f32.mrb[0].mxu0
  %v1775 = vadd.f32 0.0, %v1774
  %v1776 = vpop.f32.mrb[0].mxu0
  %1777 = vdwg.mxu0
  %v1779 = vrot.slane %v1775, 6
  %v1781 = vadd.f32 %v1145, %v1779
  %v1782 = vxor.u32 %v1781, 2147483648
  %v1783 = vmul.f32 %v1782, 1.442695
  %v1784 = vpow.pop %v1783
  %v1785 = vadd.f32 %v1784, 1.0
  %v1786 = vrcp.pop %v1785
  %v1787 = vmul.f32 1.0, %v1786
  %v1788 = vadd.f32 %v1775, %v1228
  %v1790 = vrot.slane %v1788, 6
  %1791 = vrot.lane.b32.xlu0 %v1790, 64
  %v1792 = vpop.permute.xlu0 %1791
  %v1794 = vmul.f32 %v1787, %v1792
  %1796 = vrot.lane.b32.xlu0 %v1794, 64
  %v1797 = vpop.permute.xlu0 %1796
  %v1799 = vadd.f32 %v1145, %v1797
  %v1800 = vtanh.pop %v1799
  %v1802 = vrot.slane %v1800, 2
  %v1804 = vsub.f32 %v1702, %v1802
  %v1806 = vrot.slane %v1804, 6
  %1807 = vrot.lane.b32.xlu0 %v1806, 96
  %v1808 = vpop.permute.xlu0 %1807
  %v1810 = vmul.f32 %v1787, %v1808
  %1812 = vrot.lane.b32.xlu0 %v1810, 32
  %v1813 = vpop.permute.xlu0 %1812
  %v1815 = vadd.f32 %v1800, %v1813
  %v1817 = vrot.slane %v1815, 2
  %1818 = vrot.lane.b32.xlu0 %v1817, 64
  %v1819 = vpop.permute.xlu0 %1818
  %v1820 = vsel %vm141, %v1819, 0
  %1822 = vmatprep.subr.mxu0 0.0
  %1823 = vmatpush1.msra.mxu0 %v1050
  %1824 = vmatprep.subr.mxu0 0.0
  %1825 = vmatpush1.msra.mxu0 %v1051
  %1826 = vmatprep.subr.mxu0 0.0
  %1827 = vmatpush1.msra.mxu0 %v1052
  %1828 = vmatprep.subr.mxu0 0.0
  %1829 = vmatpush1.msra.mxu0 %v1053
  %1830 = vmatprep.subr.mxu0 0.0
  %1831 = vmatpush1.msra.mxu0 0.0
  %1832 = vmatprep.subr.mxu0 0.0
  %1833 = vmatpush1.msra.mxu0 0.0
  %1834 = vmatprep.subr.mxu0 0.0
  %1835 = vmatpush1.msra.mxu0 0.0
  %1836 = vmatprep.subr.mxu0 0.0
  %1837 = vmatpush1.msra.mxu0 0.0
  %1838 = vmatprep.subr.mxu0 0.0
  %1839 = vmatpush1.msra.mxu0 0.0
  %1840 = vmatprep.subr.mxu0 0.0
  %1841 = vmatpush1.msra.mxu0 0.0
  %1842 = vmatprep.subr.mxu0 0.0
  %1843 = vmatpush1.msra.mxu0 0.0
  %1844 = vmatprep.subr.mxu0 0.0
  %1845 = vmatpush1.msra.mxu0 0.0
  %1846 = vmatprep.subr.mxu0 0.0
  %1847 = vmatpush1.msra.mxu0 0.0
  %1848 = vmatprep.subr.mxu0 0.0
  %1849 = vmatpush1.msra.mxu0 0.0
  %1850 = vmatprep.subr.mxu0 0.0
  %1851 = vmatpush1.msra.mxu0 0.0
  %1852 = vmatprep.subr.mxu0 0.0
  %1853 = vmatpush1.msra.mxu0 0.0
  %1854 = vmatprep.subr.mxu0 0.0
  %1855 = vmatpush1.msra.mxu0 0.0
  %1856 = vmatprep.subr.mxu0 0.0
  %1857 = vmatpush1.msra.mxu0 0.0
  %1858 = vmatprep.subr.mxu0 0.0
  %1859 = vmatpush1.msra.mxu0 0.0
  %1860 = vmatprep.subr.mxu0 0.0
  %1861 = vmatpush1.msra.mxu0 0.0
  %1862 = vmatprep.subr.mxu0 0.0
  %1863 = vmatpush1.msra.mxu0 0.0
  %1864 = vmatprep.subr.mxu0 0.0
  %1865 = vmatpush1.msra.mxu0 0.0
  %1866 = vmatprep.subr.mxu0 0.0
  %1867 = vmatpush1.msra.mxu0 0.0
  %1868 = vmatprep.subr.mxu0 0.0
  %1869 = vmatpush1.msra.mxu0 0.0
  %1870 = vmatprep.subr.mxu0 0.0
  %1871 = vmatpush1.msra.mxu0 0.0
  %1872 = vmatprep.subr.mxu0 0.0
  %1873 = vmatpush1.msra.mxu0 0.0
  %1874 = vmatprep.subr.mxu0 0.0
  %1875 = vmatpush1.msra.mxu0 0.0
  %1876 = vmatprep.subr.mxu0 0.0
  %1877 = vmatpush1.msra.mxu0 0.0
  %1878 = vmatprep.subr.mxu0 0.0
  %1879 = vmatpush1.msra.mxu0 0.0
  %1880 = vmatprep.subr.mxu0 0.0
  %1881 = vmatpush1.msra.mxu0 0.0
  %1882 = vmatprep.subr.mxu0 0.0
  %1883 = vmatpush1.msra.mxu0 0.0
  %1884 = vmatprep.subr.mxu0 0.0
  %1885 = vmatpush1.msra.mxu0 0.0
  %1886 = vmatprep.mubr.f32.mxu0 0.0
  %1887 = vmatmul.mubr.f32.gmra.mrb[0].mxu0 %v1820
  %v1888 = vpop.f32.mrb[0].mxu0
  %v1889 = vadd.f32 0.0, %v1888
  %v1890 = vpop.f32.mrb[0].mxu0
  %1891 = vdwg.mxu0
  %v1893 = vrot.slane %v1889, 4
  %v1895 = vadd.f32 %v1145, %v1893
  %v1896 = vxor.u32 %v1895, 2147483648
  %v1897 = vmul.f32 %v1896, 1.442695
  %v1898 = vpow.pop %v1897
  %v1899 = vadd.f32 %v1898, 1.0
  %v1900 = vrcp.pop %v1899
  %v1901 = vmul.f32 1.0, %v1900
  %v1902 = vadd.f32 %v1889, %v1228
  %v1904 = vrot.slane %v1902, 4
  %1905 = vrot.lane.b32.xlu0 %v1904, 64
  %v1906 = vpop.permute.xlu0 %1905
  %v1908 = vmul.f32 %v1901, %v1906
  %1910 = vrot.lane.b32.xlu0 %v1908, 64
  %v1911 = vpop.permute.xlu0 %1910
  %v1913 = vadd.f32 %v1145, %v1911
  %v1914 = vtanh.pop %v1913
  %v1916 = vrot.slane %v1914, 2
  %v1918 = vsub.f32 %v1815, %v1916
  %v1920 = vrot.slane %v1918, 6
  %1921 = vrot.lane.b32.xlu0 %v1920, 96
  %v1922 = vpop.permute.xlu0 %1921
  %v1924 = vmul.f32 %v1901, %v1922
  %1926 = vrot.lane.b32.xlu0 %v1924, 32
  %v1927 = vpop.permute.xlu0 %1926
  %v1929 = vadd.f32 %v1914, %v1927
  %v1931 = vrot.slane %v1929, 4
  %1932 = vrot.lane.b32.xlu0 %v1931, 64
  %v1933 = vpop.permute.xlu0 %1932
  %v1934 = vsel %vm141, %v1933, 0
  %1936 = vmatprep.subr.mxu0 0.0
  %1937 = vmatpush1.msra.mxu0 %v1050
  %1938 = vmatprep.subr.mxu0 0.0
  %1939 = vmatpush1.msra.mxu0 %v1051
  %1940 = vmatprep.subr.mxu0 0.0
  %1941 = vmatpush1.msra.mxu0 %v1052
  %1942 = vmatprep.subr.mxu0 0.0
  %1943 = vmatpush1.msra.mxu0 %v1053
  %1944 = vmatprep.subr.mxu0 0.0
  %1945 = vmatpush1.msra.mxu0 0.0
  %1946 = vmatprep.subr.mxu0 0.0
  %1947 = vmatpush1.msra.mxu0 0.0
  %1948 = vmatprep.subr.mxu0 0.0
  %1949 = vmatpush1.msra.mxu0 0.0
  %1950 = vmatprep.subr.mxu0 0.0
  %1951 = vmatpush1.msra.mxu0 0.0
  %1952 = vmatprep.subr.mxu0 0.0
  %1953 = vmatpush1.msra.mxu0 0.0
  %1954 = vmatprep.subr.mxu0 0.0
  %1955 = vmatpush1.msra.mxu0 0.0
  %1956 = vmatprep.subr.mxu0 0.0
  %1957 = vmatpush1.msra.mxu0 0.0
  %1958 = vmatprep.subr.mxu0 0.0
  %1959 = vmatpush1.msra.mxu0 0.0
  %1960 = vmatprep.subr.mxu0 0.0
  %1961 = vmatpush1.msra.mxu0 0.0
  %1962 = vmatprep.subr.mxu0 0.0
  %1963 = vmatpush1.msra.mxu0 0.0
  %1964 = vmatprep.subr.mxu0 0.0
  %1965 = vmatpush1.msra.mxu0 0.0
  %1966 = vmatprep.subr.mxu0 0.0
  %1967 = vmatpush1.msra.mxu0 0.0
  %1968 = vmatprep.subr.mxu0 0.0
  %1969 = vmatpush1.msra.mxu0 0.0
  %1970 = vmatprep.subr.mxu0 0.0
  %1971 = vmatpush1.msra.mxu0 0.0
  %1972 = vmatprep.subr.mxu0 0.0
  %1973 = vmatpush1.msra.mxu0 0.0
  %1974 = vmatprep.subr.mxu0 0.0
  %1975 = vmatpush1.msra.mxu0 0.0
  %1976 = vmatprep.subr.mxu0 0.0
  %1977 = vmatpush1.msra.mxu0 0.0
  %1978 = vmatprep.subr.mxu0 0.0
  %1979 = vmatpush1.msra.mxu0 0.0
  %1980 = vmatprep.subr.mxu0 0.0
  %1981 = vmatpush1.msra.mxu0 0.0
  %1982 = vmatprep.subr.mxu0 0.0
  %1983 = vmatpush1.msra.mxu0 0.0
  %1984 = vmatprep.subr.mxu0 0.0
  %1985 = vmatpush1.msra.mxu0 0.0
  %1986 = vmatprep.subr.mxu0 0.0
  %1987 = vmatpush1.msra.mxu0 0.0
  %1988 = vmatprep.subr.mxu0 0.0
  %1989 = vmatpush1.msra.mxu0 0.0
  %1990 = vmatprep.subr.mxu0 0.0
  %1991 = vmatpush1.msra.mxu0 0.0
  %1992 = vmatprep.subr.mxu0 0.0
  %1993 = vmatpush1.msra.mxu0 0.0
  %1994 = vmatprep.subr.mxu0 0.0
  %1995 = vmatpush1.msra.mxu0 0.0
  %1996 = vmatprep.subr.mxu0 0.0
  %1997 = vmatpush1.msra.mxu0 0.0
  %1998 = vmatprep.subr.mxu0 0.0
  %1999 = vmatpush1.msra.mxu0 0.0
  %2000 = vmatprep.mubr.f32.mxu0 0.0
  %2001 = vmatmul.mubr.f32.gmra.mrb[0].mxu0 %v1934
  %v2002 = vpop.f32.mrb[0].mxu0
  %v2003 = vadd.f32 0.0, %v2002
  %v2004 = vpop.f32.mrb[0].mxu0
  %2005 = vdwg.mxu0
  %v2007 = vrot.slane %v2003, 2
  %v2009 = vadd.f32 %v1145, %v2007
  %v2010 = vxor.u32 %v2009, 2147483648
  %v2011 = vmul.f32 %v2010, 1.442695
  %v2012 = vpow.pop %v2011
  %v2013 = vadd.f32 %v2012, 1.0
  %v2014 = vrcp.pop %v2013
  %v2015 = vmul.f32 1.0, %v2014
  %v2016 = vadd.f32 %v2003, %v1228
  %v2018 = vrot.slane %v2016, 2
  %2019 = vrot.lane.b32.xlu0 %v2018, 64
  %v2020 = vpop.permute.xlu0 %2019
  %v2022 = vmul.f32 %v2015, %v2020
  %2024 = vrot.lane.b32.xlu0 %v2022, 64
  %v2025 = vpop.permute.xlu0 %2024
  %v2027 = vadd.f32 %v1145, %v2025
  %v2028 = vtanh.pop %v2027
  %v2030 = vrot.slane %v2028, 2
  %v2032 = vsub.f32 %v1929, %v2030
  %v2034 = vrot.slane %v2032, 6
  %2035 = vrot.lane.b32.xlu0 %v2034, 96
  %v2036 = vpop.permute.xlu0 %2035
  %v2038 = vmul.f32 %v2015, %v2036
  %2040 = vrot.lane.b32.xlu0 %v2038, 32
  %v2041 = vpop.permute.xlu0 %2040
  %v2043 = vadd.f32 %v2028, %v2041
  %v2045 = vrot.slane %v2043, 6
  %2046 = vrot.lane.b32.xlu0 %v2045, 64
  %v2047 = vpop.permute.xlu0 %2046
  %v2048 = vsel %vm141, %v2047, 0
  %2050 = vmatprep.subr.mxu0 0.0
  %2051 = vmatpush1.msra.mxu0 %v26
  %2052 = vmatprep.subr.mxu0 0.0
  %2053 = vmatpush1.msra.mxu0 %v27
  %2054 = vmatprep.subr.mxu0 0.0
  %2055 = vmatpush1.msra.mxu0 %v28
  %2056 = vmatprep.subr.mxu0 0.0
  %2057 = vmatpush1.msra.mxu0 %v29
  %2058 = vmatprep.subr.mxu0 0.0
  %2059 = vmatpush1.msra.mxu0 0.0
  %2060 = vmatprep.subr.mxu0 0.0
  %2061 = vmatpush1.msra.mxu0 0.0
  %2062 = vmatprep.subr.mxu0 0.0
  %2063 = vmatpush1.msra.mxu0 0.0
  %2064 = vmatprep.subr.mxu0 0.0
  %2065 = vmatpush1.msra.mxu0 0.0
  %2066 = vmatprep.subr.mxu0 0.0
  %2067 = vmatpush1.msra.mxu0 0.0
  %2068 = vmatprep.subr.mxu0 0.0
  %2069 = vmatpush1.msra.mxu0 0.0
  %2070 = vmatprep.subr.mxu0 0.0
  %2071 = vmatpush1.msra.mxu0 0.0
  %2072 = vmatprep.subr.mxu0 0.0
  %2073 = vmatpush1.msra.mxu0 0.0
  %2074 = vmatprep.subr.mxu0 0.0
  %2075 = vmatpush1.msra.mxu0 0.0
  %2076 = vmatprep.subr.mxu0 0.0
  %2077 = vmatpush1.msra.mxu0 0.0
  %2078 = vmatprep.subr.mxu0 0.0
  %2079 = vmatpush1.msra.mxu0 0.0
  %2080 = vmatprep.subr.mxu0 0.0
  %2081 = vmatpush1.msra.mxu0 0.0
  %2082 = vmatprep.subr.mxu0 0.0
  %2083 = vmatpush1.msra.mxu0 0.0
  %2084 = vmatprep.subr.mxu0 0.0
  %2085 = vmatpush1.msra.mxu0 0.0
  %2086 = vmatprep.subr.mxu0 0.0
  %2087 = vmatpush1.msra.mxu0 0.0
  %2088 = vmatprep.subr.mxu0 0.0
  %2089 = vmatpush1.msra.mxu0 0.0
  %2090 = vmatprep.subr.mxu0 0.0
  %2091 = vmatpush1.msra.mxu0 0.0
  %2092 = vmatprep.subr.mxu0 0.0
  %2093 = vmatpush1.msra.mxu0 0.0
  %2094 = vmatprep.subr.mxu0 0.0
  %2095 = vmatpush1.msra.mxu0 0.0
  %2096 = vmatprep.subr.mxu0 0.0
  %2097 = vmatpush1.msra.mxu0 0.0
  %2098 = vmatprep.subr.mxu0 0.0
  %2099 = vmatpush1.msra.mxu0 0.0
  %2100 = vmatprep.subr.mxu0 0.0
  %2101 = vmatpush1.msra.mxu0 0.0
  %2102 = vmatprep.subr.mxu0 0.0
  %2103 = vmatpush1.msra.mxu0 0.0
  %2104 = vmatprep.subr.mxu0 0.0
  %2105 = vmatpush1.msra.mxu0 0.0
  %2106 = vmatprep.subr.mxu0 0.0
  %2107 = vmatpush1.msra.mxu0 0.0
  %2108 = vmatprep.subr.mxu0 0.0
  %2109 = vmatpush1.msra.mxu0 0.0
  %2110 = vmatprep.subr.mxu0 0.0
  %2111 = vmatpush1.msra.mxu0 0.0
  %2112 = vmatprep.subr.mxu0 0.0
  %2113 = vmatpush1.msra.mxu0 0.0
  %2114 = vmatprep.mubr.f32.mxu0 0.0
  %2115 = vmatmul.mubr.f32.gmra.mrb[0].mxu0 %v2048
  %v2116 = vpop.f32.mrb[0].mxu0
  %v2117 = vadd.f32 %v108, %v2116
  %v2118 = vpop.f32.mrb[0].mxu0
  %2119 = vdwg.mxu0
  %vm2120 = vcmask 254976
  %v2121 = vsel %vm2120, %v2117, 0.0
  %2122 = vadd.xlane.f32.xlu0 %v2121
  %v2123 = vpop.xlane.xlu0 %2122
  %v2124 = vrcp.pop 32.0
  %v2125 = vmul.f32 %v2123, %v2124
  %v2126 = vsub.f32 %v2117, %v2125
  %v2127 = vmul.f32 %v2126, %v2126
  %v2128 = vsel %vm2120, %v2127, 0.0
  %2129 = vadd.xlane.f32.xlu0 %v2128
  %v2130 = vpop.xlane.xlu0 %2129
  %v2131 = vmul.f32 %v2130, %v2124
  %v2132 = vadd.f32 %v2131, 1e-05
  %v2133 = vrsqrt.pop %v2132
  %v2134 = vmul.f32 %v2126, %v2133
  %v2135 = vlaneseq
  %v2136 = vshrl.u32 %v2135, 7
  %v2137 = vsub.s32 7, %v2136
  %v2138 = vrot.slane %v30, %v2137
  %v2139 = vmul.f32 %v2134, %v2138
  %v2140 = vlaneseq
  %v2141 = vshrl.u32 %v2140, 7
  %v2142 = vsub.s32 0, %v2141
  %v2143 = vrot.slane %v31, %v2142
  %v2144 = vadd.f32 %v2139, %v2143
  %v2145 = vmax.f32 %v2144, 0.0
  %v2146 = vld [vmem:[%s5] sm:$0xff]
  %v2147 = vld [vmem:[%s5 + $0x8] sm:$0xff]
  %v2148 = vld [vmem:[%s5 + $0x10] sm:$0xff]
  %v2149 = vld [vmem:[%s5 + $0x18] sm:$0xff]
  %v2150 = vld [vmem:[%s5 + $0x20] sm:$0x7]
  %v2151 = vlaneseq
  %v2152 = vshrl.u32 %v2151, 7
  %v2153 = vsub.s32 0, %v2152
  %v2154 = vrot.slane %v2150, %v2153
  %v2156 = vsel %vm141, %v2145, 0
  %2158 = vmatprep.subr.mxu0 0.0
  %2159 = vmatpush1.msra.mxu0 %v2146
  %2160 = vmatprep.subr.mxu0 0.0
  %2161 = vmatpush1.msra.mxu0 %v2147
  %2162 = vmatprep.subr.mxu0 0.0
  %2163 = vmatpush1.msra.mxu0 %v2148
  %2164 = vmatprep.subr.mxu0 0.0
  %2165 = vmatpush1.msra.mxu0 %v2149
  %2166 = vmatprep.subr.mxu0 0.0
  %2167 = vmatpush1.msra.mxu0 0.0
  %2168 = vmatprep.subr.mxu0 0.0
  %2169 = vmatpush1.msra.mxu0 0.0
  %2170 = vmatprep.subr.mxu0 0.0
  %2171 = vmatpush1.msra.mxu0 0.0
  %2172 = vmatprep.subr.mxu0 0.0
  %2173 = vmatpush1.msra.mxu0 0.0
  %2174 = vmatprep.subr.mxu0 0.0
  %2175 = vmatpush1.msra.mxu0 0.0
  %2176 = vmatprep.subr.mxu0 0.0
  %2177 = vmatpush1.msra.mxu0 0.0
  %2178 = vmatprep.subr.mxu0 0.0
  %2179 = vmatpush1.msra.mxu0 0.0
  %2180 = vmatprep.subr.mxu0 0.0
  %2181 = vmatpush1.msra.mxu0 0.0
  %2182 = vmatprep.subr.mxu0 0.0
  %2183 = vmatpush1.msra.mxu0 0.0
  %2184 = vmatprep.subr.mxu0 0.0
  %2185 = vmatpush1.msra.mxu0 0.0
  %2186 = vmatprep.subr.mxu0 0.0
  %2187 = vmatpush1.msra.mxu0 0.0
  %2188 = vmatprep.subr.mxu0 0.0
  %2189 = vmatpush1.msra.mxu0 0.0
  %2190 = vmatprep.subr.mxu0 0.0
  %2191 = vmatpush1.msra.mxu0 0.0
  %2192 = vmatprep.subr.mxu0 0.0
  %2193 = vmatpush1.msra.mxu0 0.0
  %2194 = vmatprep.subr.mxu0 0.0
  %2195 = vmatpush1.msra.mxu0 0.0
  %2196 = vmatprep.subr.mxu0 0.0
  %2197 = vmatpush1.msra.mxu0 0.0
  %2198 = vmatprep.subr.mxu0 0.0
  %2199 = vmatpush1.msra.mxu0 0.0
  %2200 = vmatprep.subr.mxu0 0.0
  %2201 = vmatpush1.msra.mxu0 0.0
  %2202 = vmatprep.subr.mxu0 0.0
  %2203 = vmatpush1.msra.mxu0 0.0
  %2204 = vmatprep.subr.mxu0 0.0
  %2205 = vmatpush1.msra.mxu0 0.0
  %2206 = vmatprep.subr.mxu0 0.0
  %2207 = vmatpush1.msra.mxu0 0.0
  %2208 = vmatprep.subr.mxu0 0.0
  %2209 = vmatpush1.msra.mxu0 0.0
  %2210 = vmatprep.subr.mxu0 0.0
  %2211 = vmatpush1.msra.mxu0 0.0
  %2212 = vmatprep.subr.mxu0 0.0
  %2213 = vmatpush1.msra.mxu0 0.0
  %2214 = vmatprep.subr.mxu0 0.0
  %2215 = vmatpush1.msra.mxu0 0.0
  %2216 = vmatprep.subr.mxu0 0.0
  %2217 = vmatpush1.msra.mxu0 0.0
  %2218 = vmatprep.subr.mxu0 0.0
  %2219 = vmatpush1.msra.mxu0 0.0
  %2220 = vmatprep.subr.mxu0 0.0
  %2221 = vmatpush1.msra.mxu0 0.0
  %2222 = vmatprep.mubr.f32.mxu0 0.0
  %2223 = vmatmul.mubr.f32.gmra.mrb[0].mxu0 %v2156
  %v2224 = vpop.f32.mrb[0].mxu0
  %v2225 = vadd.f32 %v2154, %v2224
  %v2226 = vpop.f32.mrb[0].mxu0
  %2227 = vdwg.mxu0
  %v2228 = vsel %vm2120, %v2225, 0.0
  %2229 = vadd.xlane.f32.xlu0 %v2228
  %v2230 = vpop.xlane.xlu0 %2229
  %v2231 = vmul.f32 %v2230, %v2124
  %v2232 = vsub.f32 %v2225, %v2231
  %v2233 = vmul.f32 %v2232, %v2232
  %v2234 = vsel %vm2120, %v2233, 0.0
  %2235 = vadd.xlane.f32.xlu0 %v2234
  %v2236 = vpop.xlane.xlu0 %2235
  %v2237 = vmul.f32 %v2236, %v2124
  %v2238 = vadd.f32 %v2237, 1e-05
  %v2239 = vrsqrt.pop %v2238
  %v2240 = vmul.f32 %v2232, %v2239
  %v2241 = vlaneseq
  %v2242 = vshrl.u32 %v2241, 7
  %v2243 = vsub.s32 1, %v2242
  %v2244 = vrot.slane %v2150, %v2243
  %v2245 = vmul.f32 %v2240, %v2244
  %v2246 = vlaneseq
  %v2247 = vshrl.u32 %v2246, 7
  %v2248 = vsub.s32 2, %v2247
  %v2249 = vrot.slane %v2150, %v2248
  %v2250 = vadd.f32 %v2245, %v2249
  %v2251 = vmax.f32 %v2250, 0.0
  %v2252 = vld [vmem:[%s6] sm:$0xff]
  %v2253 = vld [vmem:[%s6 + $0x8] sm:$0xff]
  %v2254 = vld [vmem:[%s6 + $0x10] sm:$0xff]
  %v2255 = vld [vmem:[%s6 + $0x18] sm:$0xff]
  %v2256 = vld [vmem:[%s6 + $0x20] sm:$0x1]
  %v2257 = vlaneseq
  %v2258 = vshrl.u32 %v2257, 7
  %v2259 = vsub.s32 0, %v2258
  %v2260 = vrot.slane %v2256, %v2259
  %v2262 = vsel %vm141, %v2251, 0
  %2264 = vmatprep.subr.mxu0 0.0
  %2265 = vmatpush1.msra.mxu0 %v2252
  %2266 = vmatprep.subr.mxu0 0.0
  %2267 = vmatpush1.msra.mxu0 %v2253
  %2268 = vmatprep.subr.mxu0 0.0
  %2269 = vmatpush1.msra.mxu0 %v2254
  %2270 = vmatprep.subr.mxu0 0.0
  %2271 = vmatpush1.msra.mxu0 %v2255
  %2272 = vmatprep.subr.mxu0 0.0
  %2273 = vmatpush1.msra.mxu0 0.0
  %2274 = vmatprep.subr.mxu0 0.0
  %2275 = vmatpush1.msra.mxu0 0.0
  %2276 = vmatprep.subr.mxu0 0.0
  %2277 = vmatpush1.msra.mxu0 0.0
  %2278 = vmatprep.subr.mxu0 0.0
  %2279 = vmatpush1.msra.mxu0 0.0
  %2280 = vmatprep.subr.mxu0 0.0
  %2281 = vmatpush1.msra.mxu0 0.0
  %2282 = vmatprep.subr.mxu0 0.0
  %2283 = vmatpush1.msra.mxu0 0.0
  %2284 = vmatprep.subr.mxu0 0.0
  %2285 = vmatpush1.msra.mxu0 0.0
  %2286 = vmatprep.subr.mxu0 0.0
  %2287 = vmatpush1.msra.mxu0 0.0
  %2288 = vmatprep.subr.mxu0 0.0
  %2289 = vmatpush1.msra.mxu0 0.0
  %2290 = vmatprep.subr.mxu0 0.0
  %2291 = vmatpush1.msra.mxu0 0.0
  %2292 = vmatprep.subr.mxu0 0.0
  %2293 = vmatpush1.msra.mxu0 0.0
  %2294 = vmatprep.subr.mxu0 0.0
  %2295 = vmatpush1.msra.mxu0 0.0
  %2296 = vmatprep.subr.mxu0 0.0
  %2297 = vmatpush1.msra.mxu0 0.0
  %2298 = vmatprep.subr.mxu0 0.0
  %2299 = vmatpush1.msra.mxu0 0.0
  %2300 = vmatprep.subr.mxu0 0.0
  %2301 = vmatpush1.msra.mxu0 0.0
  %2302 = vmatprep.subr.mxu0 0.0
  %2303 = vmatpush1.msra.mxu0 0.0
  %2304 = vmatprep.subr.mxu0 0.0
  %2305 = vmatpush1.msra.mxu0 0.0
  %2306 = vmatprep.subr.mxu0 0.0
  %2307 = vmatpush1.msra.mxu0 0.0
  %2308 = vmatprep.subr.mxu0 0.0
  %2309 = vmatpush1.msra.mxu0 0.0
  %2310 = vmatprep.subr.mxu0 0.0
  %2311 = vmatpush1.msra.mxu0 0.0
  %2312 = vmatprep.subr.mxu0 0.0
  %2313 = vmatpush1.msra.mxu0 0.0
  %2314 = vmatprep.subr.mxu0 0.0
  %2315 = vmatpush1.msra.mxu0 0.0
  %2316 = vmatprep.subr.mxu0 0.0
  %2317 = vmatpush1.msra.mxu0 0.0
  %2318 = vmatprep.subr.mxu0 0.0
  %2319 = vmatpush1.msra.mxu0 0.0
  %2320 = vmatprep.subr.mxu0 0.0
  %2321 = vmatpush1.msra.mxu0 0.0
  %2322 = vmatprep.subr.mxu0 0.0
  %2323 = vmatpush1.msra.mxu0 0.0
  %2324 = vmatprep.subr.mxu0 0.0
  %2325 = vmatpush1.msra.mxu0 0.0
  %2326 = vmatprep.subr.mxu0 0.0
  %2327 = vmatpush1.msra.mxu0 0.0
  %2328 = vmatprep.mubr.f32.mxu0 0.0
  %2329 = vmatmul.mubr.f32.gmra.mrb[0].mxu0 %v2262
  %v2330 = vpop.f32.mrb[0].mxu0
  %v2331 = vadd.f32 %v2260, %v2330
  %v2332 = vpop.f32.mrb[0].mxu0
  %2333 = vdwg.mxu0
  %vm2334 = vcmask 1024
  %2335 = vst.msk [vmem:[%s7] sm:$0x3] %vm2334, %v2331
  // Predicated region
  $region30: #{tpu_custom_call.1} parent=0 // pred_check
    _
  $region31: #{tpu_custom_call.1} parent=0 // pred_check_branch
    %2337 = sbr.rel (0) target = $region33
  $region32: #{tpu_custom_call.1} parent=0 // pred_region
    _
  $region33: #{tpu_custom_call.1} parent=0 // pred_fallthru
    _
  // Predicated region
  $region34: #{tpu_custom_call.1} parent=0 // pred_check
    _
  $region35: #{tpu_custom_call.1} parent=0 // pred_check_branch
    %2339 = sbr.rel (0) target = $region37
  $region36: #{tpu_custom_call.1} parent=0 // pred_region
    _
  $region37: #{tpu_custom_call.1} parent=0 // pred_fallthru
    _

</llo_original>
